<compile_context>
chip_gen: v6e
topology: v6e:2x2x1
jax: 0.10.0
libtpu: 0.0.40
codegen_flags: <defaults>
</compile_context>

<pallas_src>
import math

import numpy as np

import jax
import jax.numpy as jnp
from jax import lax
from jax.experimental import pallas as pl

B, T, S, C_IN = 2, 8, 16, 4            # batch, time steps, pixel-set size, input channels
H1, H2 = 32, 64                         # MLP1 hidden sizes
D = 128                                 # d_model
N_HEAD, D_K = 4, D // 4                 # TemporalAttentionEncoder(4, 128)
N_CLASSES = 20
N_CLASSES_PAD = 128                     # lane-dense logits, sliced back to 20 in the wrapper
BN_EPS = 1e-5

# --------------------- packed-constant slab layout (static, host-side) ---------------------
# Slab A: 128 lanes wide.  Slab B: 256 lanes wide.  Every entry starts on an 8-row
# (sublane-group) boundary so all in-kernel static slices stay tile-aligned.

def _build_layout(entries):
    offs, r = {}, 0
    for name, rows in entries:
        r = (r + 7) & ~7
        offs[name] = r
        r += rows
    return offs, (r + 7) & ~7

OFF_A, ROWS_A = _build_layout([
    ("w1a", C_IN), ("b1a", 1),
    ("w1b", H1), ("b1b", 1),
    ("w2", 2 * H2), ("b2", 1),
    ("pe", B * T),
    ("hsel_t", N_HEAD),
    ("w3", D), ("b3", 1),
    ("w4a", D), ("b4a", 1),
    ("w4b", 64), ("b4b", 1),
    ("w4c", 32), ("b4c", 1),
])
OFF_B, ROWS_B = _build_layout([
    ("gsel", B * T),
    ("wqk", D), ("bqk", 1),
])
W_A, W_B = 128, 2 * D


# ------------------------------------ fused Pallas kernel ------------------------------------

def _fused_kernel(x_ref, ca_ref, cb_ref, o_ref):
    # Static ref-window loads out of the two packed constant slabs (Python-int slices).
    def lda(name, rows, cols, row_off=0):
        r = OFF_A[name] + row_off
        return ca_ref[r:r + rows, 0:cols]

    def ldb(name, rows, cols, row_off=0):
        r = OFF_B[name] + row_off
        return cb_ref[r:r + rows, 0:cols]

    # ---- SpatialEncoder: per-pixel MLP1 (C_IN -> 32 -> 64) on all B*T*S pixels at once ----
    x = x_ref[...]                                                       # (B*T*S, C_IN)
    f = jnp.dot(x, lda("w1a", C_IN, H1),
                preferred_element_type=jnp.float32) + lda("b1a", 1, H1)
    f = jnp.maximum(f, 0.0)
    f = jnp.dot(f, lda("w1b", H1, H2),
                preferred_element_type=jnp.float32) + lda("b1b", 1, H2)
    f = jnp.maximum(f, 0.0)                                              # (B*T*S, H2)

    # ---- pixel-set pooling (mean || unbiased std) via one selector matmul pair (MXU) ----
    gsel = ldb("gsel", B * T, B * T * S)                                 # (B*T, B*T*S)
    mu = jnp.dot(gsel, f, preferred_element_type=jnp.float32) * (1.0 / S)        # (B*T, H2)
    sq = jnp.dot(gsel, f * f, preferred_element_type=jnp.float32)                # sum of x^2
    var = (sq - S * mu * mu) * (1.0 / (S - 1))                           # unbiased variance
    sd = jnp.sqrt(jnp.maximum(var, 0.0))                                 # clamp: cancellation

    # ---- MLP2 on [mean || std] without a lane concat: row-split w2 blocks ----
    enc = (jnp.dot(mu, lda("w2", H2, D), preferred_element_type=jnp.float32)
           + jnp.dot(sd, lda("w2", H2, D, row_off=H2), preferred_element_type=jnp.float32)
           + lda("b2", 1, D))
    enc = jnp.maximum(enc, 0.0)                                          # (B*T, D)

    # ---- TAE(4, 128): + sinusoidal PE, fused Q|K projection, master-query attention ----
    e = enc + lda("pe", B * T, D)
    qk = (jnp.dot(e, ldb("wqk", D, 2 * D), preferred_element_type=jnp.float32)
          + ldb("bqk", 1, 2 * D))                                        # (B*T, 2D), one MXU pass
    q = qk[:, 0:D]                                                       # 128-aligned lane slices
    k = qk[:, D:2 * D]

    hsel_t = lda("hsel_t", N_HEAD, D)                                    # (N_HEAD, D) head selector
    scale = 1.0 / math.sqrt(D_K)
    att_rows = []
    for bi in range(B):                                                  # tiny unrolled loop over B
        r0 = bi * T
        e_b = e[r0:r0 + T, :]
        k_b = k[r0:r0 + T, :]
        qm = jnp.mean(q[r0:r0 + T, :], axis=0, keepdims=True)            # master query (1, D)
        # per-head scores: contract lanes of (k*qm) against the head selector (NT matmul)
        s = lax.dot_general(k_b * qm, hsel_t, (((1,), (1,)), ((), ())),
                            preferred_element_type=jnp.float32) * scale  # (T, N_HEAD)
        s = s - jnp.max(s, axis=0, keepdims=True)
        p = jnp.exp(s)
        p = p * pl.reciprocal(jnp.sum(p, axis=0, keepdims=True), approx=True)  # softmax over T
        p_lanes = jnp.dot(p, hsel_t, preferred_element_type=jnp.float32)       # (T, D)
        att_rows.append(jnp.sum(p_lanes * e_b, axis=0, keepdims=True))         # (1, D)
    att = jnp.concatenate(att_rows, axis=0)                              # (B, D)

    # ---- MLP3 + MLP4 decoder, batch amortized once, lane-dense padded logits ----
    h = jnp.maximum(jnp.dot(att, lda("w3", D, D), preferred_element_type=jnp.float32)
                    + lda("b3", 1, D), 0.0)                              # (B, 128)
    h = jnp.maximum(jnp.dot(h, lda("w4a", D, 64), preferred_element_type=jnp.float32)
                    + lda("b4a", 1, 64), 0.0)                            # (B, 64)
    h = jnp.maximum(jnp.dot(h, lda("w4b", 64, 32), preferred_element_type=jnp.float32)
                    + lda("b4b", 1, 32), 0.0)                            # (B, 32)
    logits = (jnp.dot(h, lda("w4c", 32, N_CLASSES_PAD), preferred_element_type=jnp.float32)
              + lda("b4c", 1, N_CLASSES_PAD))
    o_ref[...] = logits.astype(o_ref.dtype)                              # (B, 128) dense store


# ---------------------------------------- parameters ----------------------------------------

def _dense_params(key, fan_in, fan_out, scale=0.05):
    kw, kb = jax.random.split(key)
    w = scale * jax.random.normal(kw, (fan_in, fan_out), jnp.float32)
    b = scale * jax.random.normal(kb, (1, fan_out), jnp.float32)
    return w, b


def _fold_bn(w, b):
    # Eval-mode BatchNorm with deterministic init (gamma=1, beta=0, running_mean=0,
    # running_var=1) folded into the preceding linear layer.
    s = 1.0 / jnp.sqrt(1.0 + BN_EPS)
    return w * s, b * s


def positional_encoding(t_len, d_model):
    pos = np.arange(t_len, dtype=np.float32)[:, None]
    i = np.arange(d_model // 2, dtype=np.float32)[None, :]
    angle = pos / np.power(1000.0, 2.0 * i / d_model)
    pe = np.zeros((t_len, d_model), np.float32)
    pe[:, 0::2] = np.sin(angle)
    pe[:, 1::2] = np.cos(angle)
    return pe


def make_params(key):
    ks = jax.random.split(key, 9)
    p = {}
    p["mlp1_a"] = _fold_bn(*_dense_params(ks[0], C_IN, H1))
    p["mlp1_b"] = _fold_bn(*_dense_params(ks[1], H1, H2))
    p["mlp2"] = _fold_bn(*_dense_params(ks[2], 2 * H2, D))
    p["wq"], p["bq"] = _dense_params(ks[3], D, D)
    p["wk"], p["bk"] = _dense_params(ks[4], D, D)
    p["mlp3"] = _fold_bn(*_dense_params(ks[5], D, D))
    p["mlp4_a"] = _fold_bn(*_dense_params(ks[6], D, 64))
    p["mlp4_b"] = _fold_bn(*_dense_params(ks[7], 64, 32))
    p["mlp4_c"] = _dense_params(ks[8], 32, N_CLASSES)
    return p


def pack_constants(params):
    """Pack all weights/biases + selectors + PE into two f32 slabs (built once, host-side)."""
    slab_a = np.zeros((ROWS_A, W_A), np.float32)
    slab_b = np.zeros((ROWS_B, W_B), np.float32)

    def put(slab, offs, name, arr):
        a = np.asarray(arr, np.float32)
        r = offs[name]
        slab[r:r + a.shape[0], :a.shape[1]] = a

    w1a, b1a = params["mlp1_a"]; put(slab_a, OFF_A, "w1a", w1a); put(slab_a, OFF_A, "b1a", b1a)
    w1b, b1b = params["mlp1_b"]; put(slab_a, OFF_A, "w1b", w1b); put(slab_a, OFF_A, "b1b", b1b)
    w2, b2 = params["mlp2"];     put(slab_a, OFF_A, "w2", w2);   put(slab_a, OFF_A, "b2", b2)
    put(slab_a, OFF_A, "pe", np.tile(positional_encoding(T, D), (B, 1)))       # (B*T, D)
    # head selector: hsel_t[h, d] = 1 iff d // D_K == h
    put(slab_a, OFF_A, "hsel_t",
        np.kron(np.eye(N_HEAD, dtype=np.float32), np.ones((1, D_K), np.float32)))
    w3, b3 = params["mlp3"];     put(slab_a, OFF_A, "w3", w3);   put(slab_a, OFF_A, "b3", b3)
    w4a, b4a = params["mlp4_a"]; put(slab_a, OFF_A, "w4a", w4a); put(slab_a, OFF_A, "b4a", b4a)
    w4b, b4b = params["mlp4_b"]; put(slab_a, OFF_A, "w4b", w4b); put(slab_a, OFF_A, "b4b", b4b)
    w4c, b4c = params["mlp4_c"]
    w4c_p = np.zeros((32, N_CLASSES_PAD), np.float32); w4c_p[:, :N_CLASSES] = np.asarray(w4c)
    b4c_p = np.zeros((1, N_CLASSES_PAD), np.float32);  b4c_p[:, :N_CLASSES] = np.asarray(b4c)
    put(slab_a, OFF_A, "w4c", w4c_p); put(slab_a, OFF_A, "b4c", b4c_p)

    # pixel-set group selector: gsel[g, j] = 1 iff j // S == g, with g = b*T + t
    put(slab_b, OFF_B, "gsel",
        np.kron(np.eye(B * T, dtype=np.float32), np.ones((1, S), np.float32)))
    wqk = np.concatenate([np.asarray(params["wq"]), np.asarray(params["wk"])], axis=1)
    bqk = np.concatenate([np.asarray(params["bq"]), np.asarray(params["bk"])], axis=1)
    put(slab_b, OFF_B, "wqk", wqk); put(slab_b, OFF_B, "bqk", bqk)

    return jnp.asarray(slab_a), jnp.asarray(slab_b)


# ------------------------------------------ forward ------------------------------------------

@jax.jit
def pse_tae_forward(slab_a, slab_b, x):
    # x: (B, T, S, C_IN) pixel-set time series, channels-last.
    x2 = x.reshape(B * T * S, C_IN)
    logits_pad = pl.pallas_call(
        _fused_kernel,
        out_shape=jax.ShapeDtypeStruct((B, N_CLASSES_PAD), jnp.float32),
    )(x2, slab_a, slab_b)                      # single invocation, whole arrays in VMEM
    return logits_pad[:, :N_CLASSES]


if __name__ == "__main__":
    key = jax.random.PRNGKey(0)
    kx, kp = jax.random.split(key)
    params = make_params(kp)
    slab_a, slab_b = pack_constants(params)    # built once, outside the per-call path
    x = jax.random.normal(kx, (B, T, S, C_IN), jnp.float32)
    out = pse_tae_forward(slab_a, slab_b, x)
    out = jax.block_until_ready(out)
    assert out.shape == (B, N_CLASSES)
    assert bool(jnp.all(jnp.isfinite(out)))
    print("KERNEL_OK")
</pallas_src>

<mosaic_0001>
module attributes {stable_mosaic.version = 11 : i64} {
  func.func @_fused_kernel(%arg0: memref<256x4xf32, #tpu.memory_space<vmem>>, %arg1: memref<600x128xf32, #tpu.memory_space<vmem>>, %arg2: memref<152x256xf32, #tpu.memory_space<vmem>>, %arg3: memref<2x128xf32, #tpu.memory_space<vmem>>) attributes {dimension_semantics = [], scalar_prefetch = 0 : i64, scratch_operands = 0 : i64, tpu.core_type = #tpu.core_type<tc>} {
    %c0 = arith.constant 0 : index
    %c0_0 = arith.constant 0 : index
    %0 = vector.load %arg0[%c0, %c0_0] : memref<256x4xf32, #tpu.memory_space<vmem>>, vector<256x4xf32>
    %c0_1 = arith.constant 0 : index
    %c0_2 = arith.constant 0 : index
    %1 = vector.load %arg1[%c0_1, %c0_2] : memref<600x128xf32, #tpu.memory_space<vmem>>, vector<4x32xf32>
    %cst = arith.constant dense<0.000000e+00> : vector<256x32xf32>
    %2 = tpu.matmul %0, %1, %cst {dimension_numbers = #tpu.dot_dimension_numbers<[1], [0], [0], [1], [0, 0, 1, 1], [], []>} : vector<256x4xf32>, vector<4x32xf32>, vector<256x32xf32> -> vector<256x32xf32>
    %c8 = arith.constant 8 : index
    %c0_3 = arith.constant 0 : index
    %3 = vector.load %arg1[%c8, %c0_3] : memref<600x128xf32, #tpu.memory_space<vmem>>, vector<1x32xf32>
    %4 = vector.broadcast %3 : vector<1x32xf32> to vector<256x32xf32>
    %5 = arith.addf %2, %4 : vector<256x32xf32>
    %cst_4 = arith.constant 0.000000e+00 : f32
    %6 = vector.broadcast %cst_4 : f32 to vector<256x32xf32>
    %7 = arith.maximumf %5, %6 : vector<256x32xf32>
    %c16 = arith.constant 16 : index
    %c0_5 = arith.constant 0 : index
    %8 = vector.load %arg1[%c16, %c0_5] : memref<600x128xf32, #tpu.memory_space<vmem>>, vector<32x64xf32>
    %cst_6 = arith.constant dense<0.000000e+00> : vector<256x64xf32>
    %9 = tpu.matmul %7, %8, %cst_6 {dimension_numbers = #tpu.dot_dimension_numbers<[1], [0], [0], [1], [0, 0, 1, 1], [], []>} : vector<256x32xf32>, vector<32x64xf32>, vector<256x64xf32> -> vector<256x64xf32>
    %c48 = arith.constant 48 : index
    %c0_7 = arith.constant 0 : index
    %10 = vector.load %arg1[%c48, %c0_7] : memref<600x128xf32, #tpu.memory_space<vmem>>, vector<1x64xf32>
    %11 = vector.broadcast %10 : vector<1x64xf32> to vector<256x64xf32>
    %12 = arith.addf %9, %11 : vector<256x64xf32>
    %cst_8 = arith.constant 0.000000e+00 : f32
    %13 = vector.broadcast %cst_8 : f32 to vector<256x64xf32>
    %14 = arith.maximumf %12, %13 : vector<256x64xf32>
    %c0_9 = arith.constant 0 : index
    %c0_10 = arith.constant 0 : index
    %15 = vector.load %arg2[%c0_9, %c0_10] : memref<152x256xf32, #tpu.memory_space<vmem>>, vector<16x256xf32>
    %cst_11 = arith.constant dense<0.000000e+00> : vector<16x64xf32>
    %16 = tpu.matmul %15, %14, %cst_11 {dimension_numbers = #tpu.dot_dimension_numbers<[1], [0], [0], [1], [0, 0, 1, 1], [], []>} : vector<16x256xf32>, vector<256x64xf32>, vector<16x64xf32> -> vector<16x64xf32>
    %cst_12 = arith.constant 6.250000e-02 : f32
    %17 = vector.broadcast %cst_12 : f32 to vector<16x64xf32>
    %18 = arith.mulf %16, %17 : vector<16x64xf32>
    %19 = arith.mulf %14, %14 : vector<256x64xf32>
    %cst_13 = arith.constant dense<0.000000e+00> : vector<16x64xf32>
    %20 = tpu.matmul %15, %19, %cst_13 {dimension_numbers = #tpu.dot_dimension_numbers<[1], [0], [0], [1], [0, 0, 1, 1], [], []>} : vector<16x256xf32>, vector<256x64xf32>, vector<16x64xf32> -> vector<16x64xf32>
    %cst_14 = arith.constant 1.600000e+01 : f32
    %21 = vector.broadcast %cst_14 : f32 to vector<16x64xf32>
    %22 = arith.mulf %21, %18 : vector<16x64xf32>
    %23 = arith.mulf %22, %18 : vector<16x64xf32>
    %24 = arith.subf %20, %23 : vector<16x64xf32>
    %cst_15 = arith.constant 0.0666666701 : f32
    %25 = vector.broadcast %cst_15 : f32 to vector<16x64xf32>
    %26 = arith.mulf %24, %25 : vector<16x64xf32>
    %cst_16 = arith.constant 0.000000e+00 : f32
    %27 = vector.broadcast %cst_16 : f32 to vector<16x64xf32>
    %28 = arith.maximumf %26, %27 : vector<16x64xf32>
    %29 = math.sqrt %28 : vector<16x64xf32>
    %c56 = arith.constant 56 : index
    %c0_17 = arith.constant 0 : index
    %30 = vector.load %arg1[%c56, %c0_17] : memref<600x128xf32, #tpu.memory_space<vmem>>, vector<64x128xf32>
    %cst_18 = arith.constant dense<0.000000e+00> : vector<16x128xf32>
    %31 = tpu.matmul %18, %30, %cst_18 {dimension_numbers = #tpu.dot_dimension_numbers<[1], [0], [0], [1], [0, 0, 1, 1], [], []>} : vector<16x64xf32>, vector<64x128xf32>, vector<16x128xf32> -> vector<16x128xf32>
    %c120 = arith.constant 120 : index
    %c0_19 = arith.constant 0 : index
    %32 = vector.load %arg1[%c120, %c0_19] : memref<600x128xf32, #tpu.memory_space<vmem>>, vector<64x128xf32>
    %cst_20 = arith.constant dense<0.000000e+00> : vector<16x128xf32>
    %33 = tpu.matmul %29, %32, %cst_20 {dimension_numbers = #tpu.dot_dimension_numbers<[1], [0], [0], [1], [0, 0, 1, 1], [], []>} : vector<16x64xf32>, vector<64x128xf32>, vector<16x128xf32> -> vector<16x128xf32>
    %34 = arith.addf %31, %33 : vector<16x128xf32>
    %c184 = arith.constant 184 : index
    %c0_21 = arith.constant 0 : index
    %35 = vector.load %arg1[%c184, %c0_21] : memref<600x128xf32, #tpu.memory_space<vmem>>, vector<1x128xf32>
    %36 = vector.broadcast %35 : vector<1x128xf32> to vector<16x128xf32>
    %37 = arith.addf %34, %36 : vector<16x128xf32>
    %cst_22 = arith.constant 0.000000e+00 : f32
    %38 = vector.broadcast %cst_22 : f32 to vector<16x128xf32>
    %39 = arith.maximumf %37, %38 : vector<16x128xf32>
    %c192 = arith.constant 192 : index
    %c0_23 = arith.constant 0 : index
    %40 = vector.load %arg1[%c192, %c0_23] : memref<600x128xf32, #tpu.memory_space<vmem>>, vector<16x128xf32>
    %41 = arith.addf %39, %40 : vector<16x128xf32>
    %c16_24 = arith.constant 16 : index
    %c0_25 = arith.constant 0 : index
    %42 = vector.load %arg2[%c16_24, %c0_25] : memref<152x256xf32, #tpu.memory_space<vmem>>, vector<128x256xf32>
    %cst_26 = arith.constant dense<0.000000e+00> : vector<16x256xf32>
    %43 = tpu.matmul %41, %42, %cst_26 {dimension_numbers = #tpu.dot_dimension_numbers<[1], [0], [0], [1], [0, 0, 1, 1], [], []>} : vector<16x128xf32>, vector<128x256xf32>, vector<16x256xf32> -> vector<16x256xf32>
    %c144 = arith.constant 144 : index
    %c0_27 = arith.constant 0 : index
    %44 = vector.load %arg2[%c144, %c0_27] : memref<152x256xf32, #tpu.memory_space<vmem>>, vector<1x256xf32>
    %45 = vector.broadcast %44 : vector<1x256xf32> to vector<16x256xf32>
    %46 = arith.addf %43, %45 : vector<16x256xf32>
    %47 = vector.extract_strided_slice %46 {offsets = [0, 0], sizes = [16, 128], strides = [1, 1]} : vector<16x256xf32> to vector<16x128xf32>
    %48 = vector.extract_strided_slice %46 {offsets = [0, 128], sizes = [16, 128], strides = [1, 1]} : vector<16x256xf32> to vector<16x128xf32>
    %c208 = arith.constant 208 : index
    %c0_28 = arith.constant 0 : index
    %49 = vector.load %arg1[%c208, %c0_28] : memref<600x128xf32, #tpu.memory_space<vmem>>, vector<4x128xf32>
    %50 = vector.extract_strided_slice %41 {offsets = [0, 0], sizes = [8, 128], strides = [1, 1]} : vector<16x128xf32> to vector<8x128xf32>
    %51 = vector.extract_strided_slice %48 {offsets = [0, 0], sizes = [8, 128], strides = [1, 1]} : vector<16x128xf32> to vector<8x128xf32>
    %52 = vector.extract_strided_slice %47 {offsets = [0, 0], sizes = [8, 128], strides = [1, 1]} : vector<16x128xf32> to vector<8x128xf32>
    %cst_29 = arith.constant dense<0.000000e+00> : vector<128xf32>
    %53 = vector.multi_reduction <add>, %52, %cst_29 [0] : vector<8x128xf32> to vector<128xf32>
    %54 = vector.shape_cast %53 : vector<128xf32> to vector<1x128xf32>
    %cst_30 = arith.constant 8.000000e+00 : f32
    %55 = vector.broadcast %cst_30 : f32 to vector<1x128xf32>
    %56 = arith.divf %54, %55 : vector<1x128xf32>
    %57 = vector.broadcast %56 : vector<1x128xf32> to vector<8x128xf32>
    %58 = arith.mulf %51, %57 : vector<8x128xf32>
    %cst_31 = arith.constant dense<0.000000e+00> : vector<8x4xf32>
    %59 = tpu.matmul %58, %49, %cst_31 {dimension_numbers = #tpu.dot_dimension_numbers<[1], [1], [0], [0], [0, 0, 1, 0], [], []>} : vector<8x128xf32>, vector<4x128xf32>, vector<8x4xf32> -> vector<8x4xf32>
    %cst_32 = arith.constant 0.176776692 : f32
    %60 = vector.broadcast %cst_32 : f32 to vector<8x4xf32>
    %61 = arith.mulf %59, %60 : vector<8x4xf32>
    %cst_33 = arith.constant dense<0xFF800000> : vector<4xf32>
    %62 = vector.multi_reduction <maximumf>, %61, %cst_33 [0] : vector<8x4xf32> to vector<4xf32>
    %63 = vector.shape_cast %62 : vector<4xf32> to vector<1x4xf32>
    %64 = vector.broadcast %63 : vector<1x4xf32> to vector<8x4xf32>
    %65 = arith.subf %61, %64 : vector<8x4xf32>
    %66 = math.exp %65 : vector<8x4xf32>
    %cst_34 = arith.constant dense<0.000000e+00> : vector<4xf32>
    %67 = vector.multi_reduction <add>, %66, %cst_34 [0] : vector<8x4xf32> to vector<4xf32>
    %68 = vector.shape_cast %67 : vector<4xf32> to vector<1x4xf32>
    %69 = tpu.reciprocal %68 {approx = true} : vector<1x4xf32> -> vector<1x4xf32>
    %70 = vector.broadcast %69 : vector<1x4xf32> to vector<8x4xf32>
    %71 = arith.mulf %66, %70 : vector<8x4xf32>
    %cst_35 = arith.constant dense<0.000000e+00> : vector<8x128xf32>
    %72 = tpu.matmul %71, %49, %cst_35 {dimension_numbers = #tpu.dot_dimension_numbers<[1], [0], [0], [1], [0, 0, 1, 1], [], []>} : vector<8x4xf32>, vector<4x128xf32>, vector<8x128xf32> -> vector<8x128xf32>
    %73 = arith.mulf %72, %50 : vector<8x128xf32>
    %cst_36 = arith.constant dense<0.000000e+00> : vector<128xf32>
    %74 = vector.multi_reduction <add>, %73, %cst_36 [0] : vector<8x128xf32> to vector<128xf32>
    %75 = vector.shape_cast %74 : vector<128xf32> to vector<1x128xf32>
    %76 = vector.extract_strided_slice %41 {offsets = [8, 0], sizes = [8, 128], strides = [1, 1]} : vector<16x128xf32> to vector<8x128xf32>
    %77 = vector.extract_strided_slice %48 {offsets = [8, 0], sizes = [8, 128], strides = [1, 1]} : vector<16x128xf32> to vector<8x128xf32>
    %78 = vector.extract_strided_slice %47 {offsets = [8, 0], sizes = [8, 128], strides = [1, 1]} : vector<16x128xf32> to vector<8x128xf32>
    %cst_37 = arith.constant dense<0.000000e+00> : vector<128xf32>
    %79 = vector.multi_reduction <add>, %78, %cst_37 [0] : vector<8x128xf32> to vector<128xf32>
    %80 = vector.shape_cast %79 : vector<128xf32> to vector<1x128xf32>
    %cst_38 = arith.constant 8.000000e+00 : f32
    %81 = vector.broadcast %cst_38 : f32 to vector<1x128xf32>
    %82 = arith.divf %80, %81 : vector<1x128xf32>
    %83 = vector.broadcast %82 : vector<1x128xf32> to vector<8x128xf32>
    %84 = arith.mulf %77, %83 : vector<8x128xf32>
    %cst_39 = arith.constant dense<0.000000e+00> : vector<8x4xf32>
    %85 = tpu.matmul %84, %49, %cst_39 {dimension_numbers = #tpu.dot_dimension_numbers<[1], [1], [0], [0], [0, 0, 1, 0], [], []>} : vector<8x128xf32>, vector<4x128xf32>, vector<8x4xf32> -> vector<8x4xf32>
    %cst_40 = arith.constant 0.176776692 : f32
    %86 = vector.broadcast %cst_40 : f32 to vector<8x4xf32>
    %87 = arith.mulf %85, %86 : vector<8x4xf32>
    %cst_41 = arith.constant dense<0xFF800000> : vector<4xf32>
    %88 = vector.multi_reduction <maximumf>, %87, %cst_41 [0] : vector<8x4xf32> to vector<4xf32>
    %89 = vector.shape_cast %88 : vector<4xf32> to vector<1x4xf32>
    %90 = vector.broadcast %89 : vector<1x4xf32> to vector<8x4xf32>
    %91 = arith.subf %87, %90 : vector<8x4xf32>
    %92 = math.exp %91 : vector<8x4xf32>
    %cst_42 = arith.constant dense<0.000000e+00> : vector<4xf32>
    %93 = vector.multi_reduction <add>, %92, %cst_42 [0] : vector<8x4xf32> to vector<4xf32>
    %94 = vector.shape_cast %93 : vector<4xf32> to vector<1x4xf32>
    %95 = tpu.reciprocal %94 {approx = true} : vector<1x4xf32> -> vector<1x4xf32>
    %96 = vector.broadcast %95 : vector<1x4xf32> to vector<8x4xf32>
    %97 = arith.mulf %92, %96 : vector<8x4xf32>
    %cst_43 = arith.constant dense<0.000000e+00> : vector<8x128xf32>
    %98 = tpu.matmul %97, %49, %cst_43 {dimension_numbers = #tpu.dot_dimension_numbers<[1], [0], [0], [1], [0, 0, 1, 1], [], []>} : vector<8x4xf32>, vector<4x128xf32>, vector<8x128xf32> -> vector<8x128xf32>
    %99 = arith.mulf %98, %76 : vector<8x128xf32>
    %cst_44 = arith.constant dense<0.000000e+00> : vector<128xf32>
    %100 = vector.multi_reduction <add>, %99, %cst_44 [0] : vector<8x128xf32> to vector<128xf32>
    %101 = vector.shape_cast %100 : vector<128xf32> to vector<1x128xf32>
    %102 = tpu.concatenate %75, %101 in 0 : vector<1x128xf32>, vector<1x128xf32> -> vector<2x128xf32>
    %c216 = arith.constant 216 : index
    %c0_45 = arith.constant 0 : index
    %103 = vector.load %arg1[%c216, %c0_45] : memref<600x128xf32, #tpu.memory_space<vmem>>, vector<128x128xf32>
    %cst_46 = arith.constant dense<0.000000e+00> : vector<2x128xf32>
    %104 = tpu.matmul %102, %103, %cst_46 {dimension_numbers = #tpu.dot_dimension_numbers<[1], [0], [0], [1], [0, 0, 1, 1], [], []>} : vector<2x128xf32>, vector<128x128xf32>, vector<2x128xf32> -> vector<2x128xf32>
    %c344 = arith.constant 344 : index
    %c0_47 = arith.constant 0 : index
    %105 = vector.load %arg1[%c344, %c0_47] : memref<600x128xf32, #tpu.memory_space<vmem>>, vector<1x128xf32>
    %106 = vector.broadcast %105 : vector<1x128xf32> to vector<2x128xf32>
    %107 = arith.addf %104, %106 : vector<2x128xf32>
    %cst_48 = arith.constant 0.000000e+00 : f32
    %108 = vector.broadcast %cst_48 : f32 to vector<2x128xf32>
    %109 = arith.maximumf %107, %108 : vector<2x128xf32>
    %c352 = arith.constant 352 : index
    %c0_49 = arith.constant 0 : index
    %110 = vector.load %arg1[%c352, %c0_49] : memref<600x128xf32, #tpu.memory_space<vmem>>, vector<128x64xf32>
    %cst_50 = arith.constant dense<0.000000e+00> : vector<2x64xf32>
    %111 = tpu.matmul %109, %110, %cst_50 {dimension_numbers = #tpu.dot_dimension_numbers<[1], [0], [0], [1], [0, 0, 1, 1], [], []>} : vector<2x128xf32>, vector<128x64xf32>, vector<2x64xf32> -> vector<2x64xf32>
    %c480 = arith.constant 480 : index
    %c0_51 = arith.constant 0 : index
    %112 = vector.load %arg1[%c480, %c0_51] : memref<600x128xf32, #tpu.memory_space<vmem>>, vector<1x64xf32>
    %113 = vector.broadcast %112 : vector<1x64xf32> to vector<2x64xf32>
    %114 = arith.addf %111, %113 : vector<2x64xf32>
    %cst_52 = arith.constant 0.000000e+00 : f32
    %115 = vector.broadcast %cst_52 : f32 to vector<2x64xf32>
    %116 = arith.maximumf %114, %115 : vector<2x64xf32>
    %c488 = arith.constant 488 : index
    %c0_53 = arith.constant 0 : index
    %117 = vector.load %arg1[%c488, %c0_53] : memref<600x128xf32, #tpu.memory_space<vmem>>, vector<64x32xf32>
    %cst_54 = arith.constant dense<0.000000e+00> : vector<2x32xf32>
    %118 = tpu.matmul %116, %117, %cst_54 {dimension_numbers = #tpu.dot_dimension_numbers<[1], [0], [0], [1], [0, 0, 1, 1], [], []>} : vector<2x64xf32>, vector<64x32xf32>, vector<2x32xf32> -> vector<2x32xf32>
    %c552 = arith.constant 552 : index
    %c0_55 = arith.constant 0 : index
    %119 = vector.load %arg1[%c552, %c0_55] : memref<600x128xf32, #tpu.memory_space<vmem>>, vector<1x32xf32>
    %120 = vector.broadcast %119 : vector<1x32xf32> to vector<2x32xf32>
    %121 = arith.addf %118, %120 : vector<2x32xf32>
    %cst_56 = arith.constant 0.000000e+00 : f32
    %122 = vector.broadcast %cst_56 : f32 to vector<2x32xf32>
    %123 = arith.maximumf %121, %122 : vector<2x32xf32>
    %c560 = arith.constant 560 : index
    %c0_57 = arith.constant 0 : index
    %124 = vector.load %arg1[%c560, %c0_57] : memref<600x128xf32, #tpu.memory_space<vmem>>, vector<32x128xf32>
    %cst_58 = arith.constant dense<0.000000e+00> : vector<2x128xf32>
    %125 = tpu.matmul %123, %124, %cst_58 {dimension_numbers = #tpu.dot_dimension_numbers<[1], [0], [0], [1], [0, 0, 1, 1], [], []>} : vector<2x32xf32>, vector<32x128xf32>, vector<2x128xf32> -> vector<2x128xf32>
    %c592 = arith.constant 592 : index
    %c0_59 = arith.constant 0 : index
    %126 = vector.load %arg1[%c592, %c0_59] : memref<600x128xf32, #tpu.memory_space<vmem>>, vector<1x128xf32>
    %127 = vector.broadcast %126 : vector<1x128xf32> to vector<2x128xf32>
    %128 = arith.addf %125, %127 : vector<2x128xf32>
    %c0_60 = arith.constant 0 : index
    %c0_61 = arith.constant 0 : index
    %129 = vector.load %arg3[%c0_60, %c0_61] : memref<2x128xf32, #tpu.memory_space<vmem>>, vector<2x128xf32>
    tpu.vector_store %arg3[%c0_60, %c0_61], %128 {strides = array<i32>} : memref<2x128xf32, #tpu.memory_space<vmem>>, vector<2x128xf32>,
    return
  }
}

</mosaic_0001>

<llo_original>
// kernel: pse_tae_forward.1
$region0: #{pse_tae_forward.1}
  #allocation0 [shape = 'u32[]', space=smem, size = 0x4, offset = 0x4, fixed_abs, tag = 'smem constant byte address 0x4 - core index']
  #allocation1 [shape = 'u32[144,128]{1,0:T(1,128)}', space=vmem, size = 0x12000, scoped, tag = 'internal scratch']
  %s0 = inlined_call_operand.vmem [shape: f32[256,4], index: 0, kind: input, shape index: {}]
  %s1 = inlined_call_operand.hbm [shape: f32[600,128], index: 1, kind: input, shape index: {}]
  %s2 = inlined_call_operand.vmem [shape: f32[152,256], index: 2, kind: input, shape index: {}]
  %s3 = inlined_call_operand.hbm [shape: f32[2,128], index: 3, kind: output, shape index: {}]
  %s4 = sld [smem:[#allocation0]]
  $region26: #{pse_tae_forward.1} parent=0
    _
  %s6 = ssub.s32 1, %s4
  %s7 = scalar_select 0, %s6, %s4
  $region1: #{pse_tae_forward.1} parent=0
    #allocation2 [shape = 'u8[307200]{0}', space=vmem, size = 0x4b000, scoped, tag = 'input window, operand 1, single buffered']
    #allocation3 [shape = 's32[1]{0}', space=sflag, size = 0x4, scoped, tag = 'scoped memory for pse_tae_forward.1']
    #allocation4 [shape = 's32[1]{0}', space=sflag, size = 0x4, scoped, tag = 'scoped memory for pse_tae_forward.1']
    #allocation5 [shape = 'u8[1024]{0}', space=vmem, size = 0x400, scoped, tag = 'output window, operand 0, single buffered']
    %8 = vsyncpa [#allocation3], 0
    %9 = vsyncpa [#allocation4], 0
    // Predicated region
    $region2: #{pse_tae_forward.1} parent=1 // pred_check
      _
    $region3: #{pse_tae_forward.1} parent=1 // pred_check_branch
      %11 = sbr.rel (0) target = $region5
    $region4: #{pse_tae_forward.1} parent=1 // pred_region
      _
    $region5: #{pse_tae_forward.1} parent=1 // pred_fallthru
      _
    // Predicated region
    $region6: #{pse_tae_forward.1} parent=1 // pred_check
      _
    $region7: #{pse_tae_forward.1} parent=1 // pred_check_branch
      %13 = sbr.rel (0) target = $region9
    $region8: #{pse_tae_forward.1} parent=1 // pred_region
      %s15 = ssub.s32 9600, 9600
      %16 = vsyncadd [#allocation3], %s15
      %s17 = sshll.u32 [#allocation2], 4
      %s18 = int_to_ptr.vmem [resolvable:$true] %s17
      %23 = dma.hbm_to_vmem [thread:$0]  %s1, 9600, %s18, [#allocation3], 128, 128, 8
    $region9: #{pse_tae_forward.1} parent=1 // pred_fallthru
      _
    // Predicated region
    $region10: #{pse_tae_forward.1} parent=1 // pred_check
      _
    $region11: #{pse_tae_forward.1} parent=1 // pred_check_branch
      %25 = sbr.rel (0) target = $region13
    $region12: #{pse_tae_forward.1} parent=1 // pred_region
      _
    $region13: #{pse_tae_forward.1} parent=1 // pred_fallthru
      _
    // Predicated region
    $region14: #{pse_tae_forward.1} parent=1 // pred_check
      _
    $region15: #{pse_tae_forward.1} parent=1 // pred_check_branch
      %27 = sbr.rel (0) target = $region17
    $region16: #{pse_tae_forward.1} parent=1 // pred_region
      %28 = dma.done [#allocation3], 9600
    $region17: #{pse_tae_forward.1} parent=1 // pred_fallthru
      _
    %v29 = vld [vmem:[%s0] sm:$0xff]
    %v30 = vld [vmem:[%s0 + $0x8] sm:$0xff]
    %v31 = vld [vmem:[%s0 + $0x10] sm:$0xff]
    %v32 = vld [vmem:[%s0 + $0x18] sm:$0xff]
    %v33 = vld [vmem:[%s0 + $0x20] sm:$0xff]
    %v34 = vld [vmem:[%s0 + $0x28] sm:$0xff]
    %v35 = vld [vmem:[%s0 + $0x30] sm:$0xff]
    %v36 = vld [vmem:[%s0 + $0x38] sm:$0xff]
    %v37 = vld [vmem:[%s0 + $0x40] sm:$0xff]
    %v38 = vld [vmem:[%s0 + $0x48] sm:$0xff]
    %v39 = vld [vmem:[%s0 + $0x50] sm:$0xff]
    %v40 = vld [vmem:[%s0 + $0x58] sm:$0xff]
    %v41 = vld [vmem:[%s0 + $0x60] sm:$0xff]
    %v42 = vld [vmem:[%s0 + $0x68] sm:$0xff]
    %v43 = vld [vmem:[%s0 + $0x70] sm:$0xff]
    %v44 = vld [vmem:[%s0 + $0x78] sm:$0xff]
    %v45 = vld [vmem:[%s0 + $0x80] sm:$0xff]
    %v46 = vld [vmem:[%s0 + $0x88] sm:$0xff]
    %v47 = vld [vmem:[%s0 + $0x90] sm:$0xff]
    %v48 = vld [vmem:[%s0 + $0x98] sm:$0xff]
    %v49 = vld [vmem:[%s0 + $0xa0] sm:$0xff]
    %v50 = vld [vmem:[%s0 + $0xa8] sm:$0xff]
    %v51 = vld [vmem:[%s0 + $0xb0] sm:$0xff]
    %v52 = vld [vmem:[%s0 + $0xb8] sm:$0xff]
    %v53 = vld [vmem:[%s0 + $0xc0] sm:$0xff]
    %v54 = vld [vmem:[%s0 + $0xc8] sm:$0xff]
    %v55 = vld [vmem:[%s0 + $0xd0] sm:$0xff]
    %v56 = vld [vmem:[%s0 + $0xd8] sm:$0xff]
    %v57 = vld [vmem:[%s0 + $0xe0] sm:$0xff]
    %v58 = vld [vmem:[%s0 + $0xe8] sm:$0xff]
    %v59 = vld [vmem:[%s0 + $0xf0] sm:$0xff]
    %v60 = vld [vmem:[%s0 + $0xf8] sm:$0xff]
    %v61 = vld [vmem:[#allocation2] sm:$0xf]
    %v62 = vld [vmem:[#allocation2 + $0x8] sm:$0x1]
    %v63 = vlaneseq
    %v64 = vshrl.u32 %v63, 7
    %v65 = vsub.s32 0, %v64
    %v66 = vrot.slane %v62, %v65
    %vm67 = vcmask 31744
    %v69 = vsel %vm67, %v29, 0
    %v72 = vsel %vm67, %v30, 0
    %v75 = vsel %vm67, %v31, 0
    %v78 = vsel %vm67, %v32, 0
    %v81 = vsel %vm67, %v33, 0
    %v84 = vsel %vm67, %v34, 0
    %v87 = vsel %vm67, %v35, 0
    %v90 = vsel %vm67, %v36, 0
    %v93 = vsel %vm67, %v37, 0
    %v96 = vsel %vm67, %v38, 0
    %v99 = vsel %vm67, %v39, 0
    %v102 = vsel %vm67, %v40, 0
    %v105 = vsel %vm67, %v41, 0
    %v108 = vsel %vm67, %v42, 0
    %v111 = vsel %vm67, %v43, 0
    %v114 = vsel %vm67, %v44, 0
    %v117 = vsel %vm67, %v45, 0
    %v120 = vsel %vm67, %v46, 0
    %v123 = vsel %vm67, %v47, 0
    %v126 = vsel %vm67, %v48, 0
    %v129 = vsel %vm67, %v49, 0
    %v132 = vsel %vm67, %v50, 0
    %v135 = vsel %vm67, %v51, 0
    %v138 = vsel %vm67, %v52, 0
    %v141 = vsel %vm67, %v53, 0
    %v144 = vsel %vm67, %v54, 0
    %v147 = vsel %vm67, %v55, 0
    %v150 = vsel %vm67, %v56, 0
    %v153 = vsel %vm67, %v57, 0
    %v156 = vsel %vm67, %v58, 0
    %v159 = vsel %vm67, %v59, 0
    %v162 = vsel %vm67, %v60, 0
    %vm164 = vcmask 1043456
    %v166 = vsel %vm164, %v61, 0
    %168 = vmatprep.subr.mxu0 0.0
    %169 = vmatpush1.msra.mxu0 0.0
    %170 = vmatprep.subr.mxu0 0.0
    %171 = vmatpush1.msra.mxu0 0.0
    %172 = vmatprep.subr.mxu0 0.0
    %173 = vmatpush1.msra.mxu0 0.0
    %174 = vmatprep.subr.mxu0 0.0
    %175 = vmatpush1.msra.mxu0 0.0
    %176 = vmatprep.subr.mxu0 0.0
    %177 = vmatpush1.msra.mxu0 0.0
    %178 = vmatprep.subr.mxu0 0.0
    %179 = vmatpush1.msra.mxu0 0.0
    %180 = vmatprep.subr.mxu0 0.0
    %181 = vmatpush1.msra.mxu0 0.0
    %182 = vmatprep.subr.mxu0 0.0
    %183 = vmatpush1.msra.mxu0 0.0
    %184 = vmatprep.subr.mxu0 0.0
    %185 = vmatpush1.msra.mxu0 0.0
    %186 = vmatprep.subr.mxu0 0.0
    %187 = vmatpush1.msra.mxu0 0.0
    %188 = vmatprep.subr.mxu0 0.0
    %189 = vmatpush1.msra.mxu0 0.0
    %190 = vmatprep.subr.mxu0 0.0
    %191 = vmatpush1.msra.mxu0 0.0
    %192 = vmatprep.subr.mxu0 0.0
    %193 = vmatpush1.msra.mxu0 0.0
    %194 = vmatprep.subr.mxu0 0.0
    %195 = vmatpush1.msra.mxu0 0.0
    %196 = vmatprep.subr.mxu0 0.0
    %197 = vmatpush1.msra.mxu0 0.0
    %198 = vmatprep.subr.mxu0 0.0
    %199 = vmatpush1.msra.mxu0 %v166
    %200 = vmatprep.subr.mxu0 0.0
    %201 = vmatpush2.msra.mxu0 0.0
    %202 = vmatprep.subr.mxu0 0.0
    %203 = vmatpush2.msra.mxu0 0.0
    %204 = vmatprep.subr.mxu0 0.0
    %205 = vmatpush2.msra.mxu0 0.0
    %206 = vmatprep.subr.mxu0 0.0
    %207 = vmatpush2.msra.mxu0 0.0
    %208 = vmatprep.subr.mxu0 0.0
    %209 = vmatpush2.msra.mxu0 0.0
    %210 = vmatprep.subr.mxu0 0.0
    %211 = vmatpush2.msra.mxu0 0.0
    %212 = vmatprep.subr.mxu0 0.0
    %213 = vmatpush2.msra.mxu0 0.0
    %214 = vmatprep.subr.mxu0 0.0
    %215 = vmatpush2.msra.mxu0 0.0
    %216 = vmatprep.subr.mxu0 0.0
    %217 = vmatpush2.msra.mxu0 0.0
    %218 = vmatprep.subr.mxu0 0.0
    %219 = vmatpush2.msra.mxu0 0.0
    %220 = vmatprep.subr.mxu0 0.0
    %221 = vmatpush2.msra.mxu0 0.0
    %222 = vmatprep.subr.mxu0 0.0
    %223 = vmatpush2.msra.mxu0 0.0
    %224 = vmatprep.subr.mxu0 0.0
    %225 = vmatpush2.msra.mxu0 0.0
    %226 = vmatprep.subr.mxu0 0.0
    %227 = vmatpush2.msra.mxu0 0.0
    %228 = vmatprep.subr.mxu0 0.0
    %229 = vmatpush2.msra.mxu0 0.0
    %230 = vmatprep.subr.mxu0 0.0
    %231 = vmatpush2.msra.mxu0 0.0
    %232 = vmatprep.mubr.f32.mxu0 0.0
    %233 = vmatmul.mubr.f32.gmra.mxu0 %v69
    %v234 = vpop.f32.mrf.mxu0
    %v235 = vadd.f32 %v66, %v234
    %v236 = vpop.f32.mrf.mxu0
    %237 = vmatprep.mubr.f32.mxu0 0.0
    %238 = vmatmul.mubr.f32.gmra.mxu0 %v72
    %v239 = vpop.f32.mrf.mxu0
    %v240 = vadd.f32 %v66, %v239
    %v241 = vpop.f32.mrf.mxu0
    %242 = vmatprep.mubr.f32.mxu0 0.0
    %243 = vmatmul.mubr.f32.gmra.mxu0 %v75
    %v244 = vpop.f32.mrf.mxu0
    %v245 = vadd.f32 %v66, %v244
    %v246 = vpop.f32.mrf.mxu0
    %247 = vmatprep.mubr.f32.mxu0 0.0
    %248 = vmatmul.mubr.f32.gmra.mxu0 %v78
    %v249 = vpop.f32.mrf.mxu0
    %v250 = vadd.f32 %v66, %v249
    %v251 = vpop.f32.mrf.mxu0
    %252 = vmatprep.mubr.f32.mxu0 0.0
    %253 = vmatmul.mubr.f32.gmra.mxu0 %v81
    %v254 = vpop.f32.mrf.mxu0
    %v255 = vadd.f32 %v66, %v254
    %v256 = vpop.f32.mrf.mxu0
    %257 = vmatprep.mubr.f32.mxu0 0.0
    %258 = vmatmul.mubr.f32.gmra.mxu0 %v84
    %v259 = vpop.f32.mrf.mxu0
    %v260 = vadd.f32 %v66, %v259
    %v261 = vpop.f32.mrf.mxu0
    %262 = vmatprep.mubr.f32.mxu0 0.0
    %263 = vmatmul.mubr.f32.gmra.mxu0 %v87
    %v264 = vpop.f32.mrf.mxu0
    %v265 = vadd.f32 %v66, %v264
    %v266 = vpop.f32.mrf.mxu0
    %267 = vmatprep.mubr.f32.mxu0 0.0
    %268 = vmatmul.mubr.f32.gmra.mxu0 %v90
    %v269 = vpop.f32.mrf.mxu0
    %v270 = vadd.f32 %v66, %v269
    %v271 = vpop.f32.mrf.mxu0
    %272 = vmatprep.mubr.f32.mxu0 0.0
    %273 = vmatmul.mubr.f32.gmra.mxu0 %v93
    %v274 = vpop.f32.mrf.mxu0
    %v275 = vadd.f32 %v66, %v274
    %v276 = vpop.f32.mrf.mxu0
    %277 = vmatprep.mubr.f32.mxu0 0.0
    %278 = vmatmul.mubr.f32.gmra.mxu0 %v96
    %v279 = vpop.f32.mrf.mxu0
    %v280 = vadd.f32 %v66, %v279
    %v281 = vpop.f32.mrf.mxu0
    %282 = vmatprep.mubr.f32.mxu0 0.0
    %283 = vmatmul.mubr.f32.gmra.mxu0 %v99
    %v284 = vpop.f32.mrf.mxu0
    %v285 = vadd.f32 %v66, %v284
    %v286 = vpop.f32.mrf.mxu0
    %287 = vmatprep.mubr.f32.mxu0 0.0
    %288 = vmatmul.mubr.f32.gmra.mxu0 %v102
    %v289 = vpop.f32.mrf.mxu0
    %v290 = vadd.f32 %v66, %v289
    %v291 = vpop.f32.mrf.mxu0
    %292 = vmatprep.mubr.f32.mxu0 0.0
    %293 = vmatmul.mubr.f32.gmra.mxu0 %v105
    %v294 = vpop.f32.mrf.mxu0
    %v295 = vadd.f32 %v66, %v294
    %v296 = vpop.f32.mrf.mxu0
    %297 = vmatprep.mubr.f32.mxu0 0.0
    %298 = vmatmul.mubr.f32.gmra.mxu0 %v108
    %v299 = vpop.f32.mrf.mxu0
    %v300 = vadd.f32 %v66, %v299
    %v301 = vpop.f32.mrf.mxu0
    %302 = vmatprep.mubr.f32.mxu0 0.0
    %303 = vmatmul.mubr.f32.gmra.mxu0 %v111
    %v304 = vpop.f32.mrf.mxu0
    %v305 = vadd.f32 %v66, %v304
    %v306 = vpop.f32.mrf.mxu0
    %307 = vmatprep.mubr.f32.mxu0 0.0
    %308 = vmatmul.mubr.f32.gmra.mxu0 %v114
    %v309 = vpop.f32.mrf.mxu0
    %v310 = vadd.f32 %v66, %v309
    %v311 = vpop.f32.mrf.mxu0
    %312 = vmatprep.mubr.f32.mxu0 0.0
    %313 = vmatmul.mubr.f32.gmra.mxu0 %v117
    %v314 = vpop.f32.mrf.mxu0
    %v315 = vadd.f32 %v66, %v314
    %v316 = vpop.f32.mrf.mxu0
    %317 = vmatprep.mubr.f32.mxu0 0.0
    %318 = vmatmul.mubr.f32.gmra.mxu0 %v120
    %v319 = vpop.f32.mrf.mxu0
    %v320 = vadd.f32 %v66, %v319
    %v321 = vpop.f32.mrf.mxu0
    %322 = vmatprep.mubr.f32.mxu0 0.0
    %323 = vmatmul.mubr.f32.gmra.mxu0 %v123
    %v324 = vpop.f32.mrf.mxu0
    %v325 = vadd.f32 %v66, %v324
    %v326 = vpop.f32.mrf.mxu0
    %327 = vmatprep.mubr.f32.mxu0 0.0
    %328 = vmatmul.mubr.f32.gmra.mxu0 %v126
    %v329 = vpop.f32.mrf.mxu0
    %v330 = vadd.f32 %v66, %v329
    %v331 = vpop.f32.mrf.mxu0
    %332 = vmatprep.mubr.f32.mxu0 0.0
    %333 = vmatmul.mubr.f32.gmra.mxu0 %v129
    %v334 = vpop.f32.mrf.mxu0
    %v335 = vadd.f32 %v66, %v334
    %v336 = vpop.f32.mrf.mxu0
    %337 = vmatprep.mubr.f32.mxu0 0.0
    %338 = vmatmul.mubr.f32.gmra.mxu0 %v132
    %v339 = vpop.f32.mrf.mxu0
    %v340 = vadd.f32 %v66, %v339
    %v341 = vpop.f32.mrf.mxu0
    %342 = vmatprep.mubr.f32.mxu0 0.0
    %343 = vmatmul.mubr.f32.gmra.mxu0 %v135
    %v344 = vpop.f32.mrf.mxu0
    %v345 = vadd.f32 %v66, %v344
    %v346 = vpop.f32.mrf.mxu0
    %347 = vmatprep.mubr.f32.mxu0 0.0
    %348 = vmatmul.mubr.f32.gmra.mxu0 %v138
    %v349 = vpop.f32.mrf.mxu0
    %v350 = vadd.f32 %v66, %v349
    %v351 = vpop.f32.mrf.mxu0
    %352 = vmatprep.mubr.f32.mxu0 0.0
    %353 = vmatmul.mubr.f32.gmra.mxu0 %v141
    %v354 = vpop.f32.mrf.mxu0
    %v355 = vadd.f32 %v66, %v354
    %v356 = vpop.f32.mrf.mxu0
    %357 = vmatprep.mubr.f32.mxu0 0.0
    %358 = vmatmul.mubr.f32.gmra.mxu0 %v144
    %v359 = vpop.f32.mrf.mxu0
    %v360 = vadd.f32 %v66, %v359
    %v361 = vpop.f32.mrf.mxu0
    %362 = vmatprep.mubr.f32.mxu0 0.0
    %363 = vmatmul.mubr.f32.gmra.mxu0 %v147
    %v364 = vpop.f32.mrf.mxu0
    %v365 = vadd.f32 %v66, %v364
    %v366 = vpop.f32.mrf.mxu0
    %367 = vmatprep.mubr.f32.mxu0 0.0
    %368 = vmatmul.mubr.f32.gmra.mxu0 %v150
    %v369 = vpop.f32.mrf.mxu0
    %v370 = vadd.f32 %v66, %v369
    %v371 = vpop.f32.mrf.mxu0
    %372 = vmatprep.mubr.f32.mxu0 0.0
    %373 = vmatmul.mubr.f32.gmra.mxu0 %v153
    %v374 = vpop.f32.mrf.mxu0
    %v375 = vadd.f32 %v66, %v374
    %v376 = vpop.f32.mrf.mxu0
    %377 = vmatprep.mubr.f32.mxu0 0.0
    %378 = vmatmul.mubr.f32.gmra.mxu0 %v156
    %v379 = vpop.f32.mrf.mxu0
    %v380 = vadd.f32 %v66, %v379
    %v381 = vpop.f32.mrf.mxu0
    %382 = vmatprep.mubr.f32.mxu0 0.0
    %383 = vmatmul.mubr.f32.gmra.mxu0 %v159
    %v384 = vpop.f32.mrf.mxu0
    %v385 = vadd.f32 %v66, %v384
    %v386 = vpop.f32.mrf.mxu0
    %387 = vmatprep.mubr.f32.mxu0 0.0
    %388 = vmatmul.mubr.f32.gmra.mxu0 %v162
    %v389 = vpop.f32.mrf.mxu0
    %v390 = vadd.f32 %v66, %v389
    %v391 = vpop.f32.mrf.mxu0
    %392 = vdwg.mxu0
    %v393 = vmax.f32 %v235, 0.0
    %v394 = vmax.f32 %v240, 0.0
    %v395 = vmax.f32 %v245, 0.0
    %v396 = vmax.f32 %v250, 0.0
    %v397 = vmax.f32 %v255, 0.0
    %v398 = vmax.f32 %v260, 0.0
    %v399 = vmax.f32 %v265, 0.0
    %v400 = vmax.f32 %v270, 0.0
    %v401 = vmax.f32 %v275, 0.0
    %v402 = vmax.f32 %v280, 0.0
    %v403 = vmax.f32 %v285, 0.0
    %v404 = vmax.f32 %v290, 0.0
    %v405 = vmax.f32 %v295, 0.0
    %v406 = vmax.f32 %v300, 0.0
    %v407 = vmax.f32 %v305, 0.0
    %v408 = vmax.f32 %v310, 0.0
    %v409 = vmax.f32 %v315, 0.0
    %v410 = vmax.f32 %v320, 0.0
    %v411 = vmax.f32 %v325, 0.0
    %v412 = vmax.f32 %v330, 0.0
    %v413 = vmax.f32 %v335, 0.0
    %v414 = vmax.f32 %v340, 0.0
    %v415 = vmax.f32 %v345, 0.0
    %v416 = vmax.f32 %v350, 0.0
    %v417 = vmax.f32 %v355, 0.0
    %v418 = vmax.f32 %v360, 0.0
    %v419 = vmax.f32 %v365, 0.0
    %v420 = vmax.f32 %v370, 0.0
    %v421 = vmax.f32 %v375, 0.0
    %v422 = vmax.f32 %v380, 0.0
    %v423 = vmax.f32 %v385, 0.0
    %v424 = vmax.f32 %v390, 0.0
    %v425 = vld [vmem:[#allocation2 + $0x10] sm:$0xff]
    %v426 = vld [vmem:[#allocation2 + $0x18] sm:$0xff]
    %v427 = vld [vmem:[#allocation2 + $0x20] sm:$0xff]
    %v428 = vld [vmem:[#allocation2 + $0x28] sm:$0xff]
    %v429 = vld [vmem:[#allocation2 + $0x30] sm:$0x1]
    %v430 = vlaneseq
    %v431 = vshrl.u32 %v430, 7
    %v432 = vsub.s32 0, %v431
    %v433 = vrot.slane %v429, %v432
    %vm434 = vcmask 261120
    %v436 = vsel %vm434, %v393, 0
    %v439 = vsel %vm434, %v394, 0
    %v442 = vsel %vm434, %v395, 0
    %v445 = vsel %vm434, %v396, 0
    %v448 = vsel %vm434, %v397, 0
    %v451 = vsel %vm434, %v398, 0
    %v454 = vsel %vm434, %v399, 0
    %v457 = vsel %vm434, %v400, 0
    %v460 = vsel %vm434, %v401, 0
    %v463 = vsel %vm434, %v402, 0
    %v466 = vsel %vm434, %v403, 0
    %v469 = vsel %vm434, %v404, 0
    %v472 = vsel %vm434, %v405, 0
    %v475 = vsel %vm434, %v406, 0
    %v478 = vsel %vm434, %v407, 0
    %v481 = vsel %vm434, %v408, 0
    %v484 = vsel %vm434, %v409, 0
    %v487 = vsel %vm434, %v410, 0
    %v490 = vsel %vm434, %v411, 0
    %v493 = vsel %vm434, %v412, 0
    %v496 = vsel %vm434, %v413, 0
    %v499 = vsel %vm434, %v414, 0
    %v502 = vsel %vm434, %v415, 0
    %v505 = vsel %vm434, %v416, 0
    %v508 = vsel %vm434, %v417, 0
    %v511 = vsel %vm434, %v418, 0
    %v514 = vsel %vm434, %v419, 0
    %v517 = vsel %vm434, %v420, 0
    %v520 = vsel %vm434, %v421, 0
    %v523 = vsel %vm434, %v422, 0
    %v526 = vsel %vm434, %v423, 0
    %v529 = vsel %vm434, %v424, 0
    %531 = vmatprep.subr.mxu0 0.0
    %532 = vmatpush1.msra.mxu0 0.0
    %533 = vmatprep.subr.mxu0 0.0
    %534 = vmatpush1.msra.mxu0 0.0
    %535 = vmatprep.subr.mxu0 0.0
    %536 = vmatpush1.msra.mxu0 0.0
    %537 = vmatprep.subr.mxu0 0.0
    %538 = vmatpush1.msra.mxu0 0.0
    %539 = vmatprep.subr.mxu0 0.0
    %540 = vmatpush1.msra.mxu0 0.0
    %541 = vmatprep.subr.mxu0 0.0
    %542 = vmatpush1.msra.mxu0 0.0
    %543 = vmatprep.subr.mxu0 0.0
    %544 = vmatpush1.msra.mxu0 0.0
    %545 = vmatprep.subr.mxu0 0.0
    %546 = vmatpush1.msra.mxu0 0.0
    %547 = vmatprep.subr.mxu0 0.0
    %548 = vmatpush1.msra.mxu0 0.0
    %549 = vmatprep.subr.mxu0 0.0
    %550 = vmatpush1.msra.mxu0 0.0
    %551 = vmatprep.subr.mxu0 0.0
    %552 = vmatpush1.msra.mxu0 0.0
    %553 = vmatprep.subr.mxu0 0.0
    %554 = vmatpush1.msra.mxu0 0.0
    %555 = vmatprep.subr.mxu0 0.0
    %556 = vmatpush1.msra.mxu0 %v428
    %557 = vmatprep.subr.mxu0 0.0
    %558 = vmatpush1.msra.mxu0 %v427
    %559 = vmatprep.subr.mxu0 0.0
    %560 = vmatpush1.msra.mxu0 %v426
    %561 = vmatprep.subr.mxu0 0.0
    %562 = vmatpush1.msra.mxu0 %v425
    %563 = vmatprep.subr.mxu0 0.0
    %564 = vmatpush2.msra.mxu0 0.0
    %565 = vmatprep.subr.mxu0 0.0
    %566 = vmatpush2.msra.mxu0 0.0
    %567 = vmatprep.subr.mxu0 0.0
    %568 = vmatpush2.msra.mxu0 0.0
    %569 = vmatprep.subr.mxu0 0.0
    %570 = vmatpush2.msra.mxu0 0.0
    %571 = vmatprep.subr.mxu0 0.0
    %572 = vmatpush2.msra.mxu0 0.0
    %573 = vmatprep.subr.mxu0 0.0
    %574 = vmatpush2.msra.mxu0 0.0
    %575 = vmatprep.subr.mxu0 0.0
    %576 = vmatpush2.msra.mxu0 0.0
    %577 = vmatprep.subr.mxu0 0.0
    %578 = vmatpush2.msra.mxu0 0.0
    %579 = vmatprep.subr.mxu0 0.0
    %580 = vmatpush2.msra.mxu0 0.0
    %581 = vmatprep.subr.mxu0 0.0
    %582 = vmatpush2.msra.mxu0 0.0
    %583 = vmatprep.subr.mxu0 0.0
    %584 = vmatpush2.msra.mxu0 0.0
    %585 = vmatprep.subr.mxu0 0.0
    %586 = vmatpush2.msra.mxu0 0.0
    %587 = vmatprep.subr.mxu0 0.0
    %588 = vmatpush2.msra.mxu0 0.0
    %589 = vmatprep.subr.mxu0 0.0
    %590 = vmatpush2.msra.mxu0 0.0
    %591 = vmatprep.subr.mxu0 0.0
    %592 = vmatpush2.msra.mxu0 0.0
    %593 = vmatprep.subr.mxu0 0.0
    %594 = vmatpush2.msra.mxu0 0.0
    %595 = vmatprep.mubr.f32.mxu0 0.0
    %596 = vmatmul.mubr.f32.gmra.mxu0 %v436
    %v597 = vpop.f32.mrf.mxu0
    %v598 = vadd.f32 %v433, %v597
    %v599 = vpop.f32.mrf.mxu0
    %600 = vmatprep.mubr.f32.mxu0 0.0
    %601 = vmatmul.mubr.f32.gmra.mxu0 %v439
    %v602 = vpop.f32.mrf.mxu0
    %v603 = vadd.f32 %v433, %v602
    %v604 = vpop.f32.mrf.mxu0
    %605 = vmatprep.mubr.f32.mxu0 0.0
    %606 = vmatmul.mubr.f32.gmra.mxu0 %v442
    %v607 = vpop.f32.mrf.mxu0
    %v608 = vadd.f32 %v433, %v607
    %v609 = vpop.f32.mrf.mxu0
    %610 = vmatprep.mubr.f32.mxu0 0.0
    %611 = vmatmul.mubr.f32.gmra.mxu0 %v445
    %v612 = vpop.f32.mrf.mxu0
    %v613 = vadd.f32 %v433, %v612
    %v614 = vpop.f32.mrf.mxu0
    %615 = vmatprep.mubr.f32.mxu0 0.0
    %616 = vmatmul.mubr.f32.gmra.mxu0 %v448
    %v617 = vpop.f32.mrf.mxu0
    %v618 = vadd.f32 %v433, %v617
    %v619 = vpop.f32.mrf.mxu0
    %620 = vmatprep.mubr.f32.mxu0 0.0
    %621 = vmatmul.mubr.f32.gmra.mxu0 %v451
    %v622 = vpop.f32.mrf.mxu0
    %v623 = vadd.f32 %v433, %v622
    %v624 = vpop.f32.mrf.mxu0
    %625 = vmatprep.mubr.f32.mxu0 0.0
    %626 = vmatmul.mubr.f32.gmra.mxu0 %v454
    %v627 = vpop.f32.mrf.mxu0
    %v628 = vadd.f32 %v433, %v627
    %v629 = vpop.f32.mrf.mxu0
    %630 = vmatprep.mubr.f32.mxu0 0.0
    %631 = vmatmul.mubr.f32.gmra.mxu0 %v457
    %v632 = vpop.f32.mrf.mxu0
    %v633 = vadd.f32 %v433, %v632
    %v634 = vpop.f32.mrf.mxu0
    %635 = vmatprep.mubr.f32.mxu0 0.0
    %636 = vmatmul.mubr.f32.gmra.mxu0 %v460
    %v637 = vpop.f32.mrf.mxu0
    %v638 = vadd.f32 %v433, %v637
    %v639 = vpop.f32.mrf.mxu0
    %640 = vmatprep.mubr.f32.mxu0 0.0
    %641 = vmatmul.mubr.f32.gmra.mxu0 %v463
    %v642 = vpop.f32.mrf.mxu0
    %v643 = vadd.f32 %v433, %v642
    %v644 = vpop.f32.mrf.mxu0
    %645 = vmatprep.mubr.f32.mxu0 0.0
    %646 = vmatmul.mubr.f32.gmra.mxu0 %v466
    %v647 = vpop.f32.mrf.mxu0
    %v648 = vadd.f32 %v433, %v647
    %v649 = vpop.f32.mrf.mxu0
    %650 = vmatprep.mubr.f32.mxu0 0.0
    %651 = vmatmul.mubr.f32.gmra.mxu0 %v469
    %v652 = vpop.f32.mrf.mxu0
    %v653 = vadd.f32 %v433, %v652
    %v654 = vpop.f32.mrf.mxu0
    %655 = vmatprep.mubr.f32.mxu0 0.0
    %656 = vmatmul.mubr.f32.gmra.mxu0 %v472
    %v657 = vpop.f32.mrf.mxu0
    %v658 = vadd.f32 %v433, %v657
    %v659 = vpop.f32.mrf.mxu0
    %660 = vmatprep.mubr.f32.mxu0 0.0
    %661 = vmatmul.mubr.f32.gmra.mxu0 %v475
    %v662 = vpop.f32.mrf.mxu0
    %v663 = vadd.f32 %v433, %v662
    %v664 = vpop.f32.mrf.mxu0
    %665 = vmatprep.mubr.f32.mxu0 0.0
    %666 = vmatmul.mubr.f32.gmra.mxu0 %v478
    %v667 = vpop.f32.mrf.mxu0
    %v668 = vadd.f32 %v433, %v667
    %v669 = vpop.f32.mrf.mxu0
    %670 = vmatprep.mubr.f32.mxu0 0.0
    %671 = vmatmul.mubr.f32.gmra.mxu0 %v481
    %v672 = vpop.f32.mrf.mxu0
    %v673 = vadd.f32 %v433, %v672
    %v674 = vpop.f32.mrf.mxu0
    %675 = vmatprep.mubr.f32.mxu0 0.0
    %676 = vmatmul.mubr.f32.gmra.mxu0 %v484
    %v677 = vpop.f32.mrf.mxu0
    %v678 = vadd.f32 %v433, %v677
    %v679 = vpop.f32.mrf.mxu0
    %680 = vmatprep.mubr.f32.mxu0 0.0
    %681 = vmatmul.mubr.f32.gmra.mxu0 %v487
    %v682 = vpop.f32.mrf.mxu0
    %v683 = vadd.f32 %v433, %v682
    %v684 = vpop.f32.mrf.mxu0
    %685 = vmatprep.mubr.f32.mxu0 0.0
    %686 = vmatmul.mubr.f32.gmra.mxu0 %v490
    %v687 = vpop.f32.mrf.mxu0
    %v688 = vadd.f32 %v433, %v687
    %v689 = vpop.f32.mrf.mxu0
    %690 = vmatprep.mubr.f32.mxu0 0.0
    %691 = vmatmul.mubr.f32.gmra.mxu0 %v493
    %v692 = vpop.f32.mrf.mxu0
    %v693 = vadd.f32 %v433, %v692
    %v694 = vpop.f32.mrf.mxu0
    %695 = vmatprep.mubr.f32.mxu0 0.0
    %696 = vmatmul.mubr.f32.gmra.mxu0 %v496
    %v697 = vpop.f32.mrf.mxu0
    %v698 = vadd.f32 %v433, %v697
    %v699 = vpop.f32.mrf.mxu0
    %700 = vmatprep.mubr.f32.mxu0 0.0
    %701 = vmatmul.mubr.f32.gmra.mxu0 %v499
    %v702 = vpop.f32.mrf.mxu0
    %v703 = vadd.f32 %v433, %v702
    %v704 = vpop.f32.mrf.mxu0
    %705 = vmatprep.mubr.f32.mxu0 0.0
    %706 = vmatmul.mubr.f32.gmra.mxu0 %v502
    %v707 = vpop.f32.mrf.mxu0
    %v708 = vadd.f32 %v433, %v707
    %v709 = vpop.f32.mrf.mxu0
    %710 = vmatprep.mubr.f32.mxu0 0.0
    %711 = vmatmul.mubr.f32.gmra.mxu0 %v505
    %v712 = vpop.f32.mrf.mxu0
    %v713 = vadd.f32 %v433, %v712
    %v714 = vpop.f32.mrf.mxu0
    %715 = vmatprep.mubr.f32.mxu0 0.0
    %716 = vmatmul.mubr.f32.gmra.mxu0 %v508
    %v717 = vpop.f32.mrf.mxu0
    %v718 = vadd.f32 %v433, %v717
    %v719 = vpop.f32.mrf.mxu0
    %720 = vmatprep.mubr.f32.mxu0 0.0
    %721 = vmatmul.mubr.f32.gmra.mxu0 %v511
    %v722 = vpop.f32.mrf.mxu0
    %v723 = vadd.f32 %v433, %v722
    %v724 = vpop.f32.mrf.mxu0
    %725 = vmatprep.mubr.f32.mxu0 0.0
    %726 = vmatmul.mubr.f32.gmra.mxu0 %v514
    %v727 = vpop.f32.mrf.mxu0
    %v728 = vadd.f32 %v433, %v727
    %v729 = vpop.f32.mrf.mxu0
    %730 = vmatprep.mubr.f32.mxu0 0.0
    %731 = vmatmul.mubr.f32.gmra.mxu0 %v517
    %v732 = vpop.f32.mrf.mxu0
    %v733 = vadd.f32 %v433, %v732
    %v734 = vpop.f32.mrf.mxu0
    %735 = vmatprep.mubr.f32.mxu0 0.0
    %736 = vmatmul.mubr.f32.gmra.mxu0 %v520
    %v737 = vpop.f32.mrf.mxu0
    %v738 = vadd.f32 %v433, %v737
    %v739 = vpop.f32.mrf.mxu0
    %740 = vmatprep.mubr.f32.mxu0 0.0
    %741 = vmatmul.mubr.f32.gmra.mxu0 %v523
    %v742 = vpop.f32.mrf.mxu0
    %v743 = vadd.f32 %v433, %v742
    %v744 = vpop.f32.mrf.mxu0
    %745 = vmatprep.mubr.f32.mxu0 0.0
    %746 = vmatmul.mubr.f32.gmra.mxu0 %v526
    %v747 = vpop.f32.mrf.mxu0
    %v748 = vadd.f32 %v433, %v747
    %v749 = vpop.f32.mrf.mxu0
    %750 = vmatprep.mubr.f32.mxu0 0.0
    %751 = vmatmul.mubr.f32.gmra.mxu0 %v529
    %v752 = vpop.f32.mrf.mxu0
    %v753 = vadd.f32 %v433, %v752
    %v754 = vpop.f32.mrf.mxu0
    %755 = vdwg.mxu0
    %v756 = vmax.f32 %v598, 0.0
    %v757 = vmax.f32 %v603, 0.0
    %v758 = vmax.f32 %v608, 0.0
    %v759 = vmax.f32 %v613, 0.0
    %v760 = vmax.f32 %v618, 0.0
    %v761 = vmax.f32 %v623, 0.0
    %v762 = vmax.f32 %v628, 0.0
    %v763 = vmax.f32 %v633, 0.0
    %v764 = vmax.f32 %v638, 0.0
    %v765 = vmax.f32 %v643, 0.0
    %v766 = vmax.f32 %v648, 0.0
    %v767 = vmax.f32 %v653, 0.0
    %v768 = vmax.f32 %v658, 0.0
    %v769 = vmax.f32 %v663, 0.0
    %v770 = vmax.f32 %v668, 0.0
    %v771 = vmax.f32 %v673, 0.0
    %v772 = vmax.f32 %v678, 0.0
    %v773 = vmax.f32 %v683, 0.0
    %v774 = vmax.f32 %v688, 0.0
    %v775 = vmax.f32 %v693, 0.0
    %v776 = vmax.f32 %v698, 0.0
    %v777 = vmax.f32 %v703, 0.0
    %v778 = vmax.f32 %v708, 0.0
    %v779 = vmax.f32 %v713, 0.0
    %v780 = vmax.f32 %v718, 0.0
    %v781 = vmax.f32 %v723, 0.0
    %v782 = vmax.f32 %v728, 0.0
    %v783 = vmax.f32 %v733, 0.0
    %v784 = vmax.f32 %v738, 0.0
    %v785 = vmax.f32 %v743, 0.0
    %v786 = vmax.f32 %v748, 0.0
    %v787 = vmax.f32 %v753, 0.0
    %v788 = vld [vmem:[%s2] sm:$0xff]
    %v789 = vld [vmem:[%s2 + $0x8] sm:$0xff]
    %v790 = vld [vmem:[%s2 + $0x10] sm:$0xff]
    %v791 = vld [vmem:[%s2 + $0x18] sm:$0xff]
    %792 = vmatprep.subr.mxu0 0.0
    %793 = vmatpush1.msra.mxu0 %v771
    %794 = vmatprep.subr.mxu0 0.0
    %795 = vmatpush1.msra.mxu0 %v770
    %796 = vmatprep.subr.mxu0 0.0
    %797 = vmatpush1.msra.mxu0 %v769
    %798 = vmatprep.subr.mxu0 0.0
    %799 = vmatpush1.msra.mxu0 %v768
    %800 = vmatprep.subr.mxu0 0.0
    %801 = vmatpush1.msra.mxu0 %v767
    %802 = vmatprep.subr.mxu0 0.0
    %803 = vmatpush1.msra.mxu0 %v766
    %804 = vmatprep.subr.mxu0 0.0
    %805 = vmatpush1.msra.mxu0 %v765
    %806 = vmatprep.subr.mxu0 0.0
    %807 = vmatpush1.msra.mxu0 %v764
    %808 = vmatprep.subr.mxu0 0.0
    %809 = vmatpush1.msra.mxu0 %v763
    %810 = vmatprep.subr.mxu0 0.0
    %811 = vmatpush1.msra.mxu0 %v762
    %812 = vmatprep.subr.mxu0 0.0
    %813 = vmatpush1.msra.mxu0 %v761
    %814 = vmatprep.subr.mxu0 0.0
    %815 = vmatpush1.msra.mxu0 %v760
    %816 = vmatprep.subr.mxu0 0.0
    %817 = vmatpush1.msra.mxu0 %v759
    %818 = vmatprep.subr.mxu0 0.0
    %819 = vmatpush1.msra.mxu0 %v758
    %820 = vmatprep.subr.mxu0 0.0
    %821 = vmatpush1.msra.mxu0 %v757
    %822 = vmatprep.subr.mxu0 0.0
    %823 = vmatpush1.msra.mxu0 %v756
    %824 = vmatprep.subr.mxu0 0.0
    %825 = vmatpush2.msra.mxu0 %v787
    %826 = vmatprep.subr.mxu0 0.0
    %827 = vmatpush2.msra.mxu0 %v786
    %828 = vmatprep.subr.mxu0 0.0
    %829 = vmatpush2.msra.mxu0 %v785
    %830 = vmatprep.subr.mxu0 0.0
    %831 = vmatpush2.msra.mxu0 %v784
    %832 = vmatprep.subr.mxu0 0.0
    %833 = vmatpush2.msra.mxu0 %v783
    %834 = vmatprep.subr.mxu0 0.0
    %835 = vmatpush2.msra.mxu0 %v782
    %836 = vmatprep.subr.mxu0 0.0
    %837 = vmatpush2.msra.mxu0 %v781
    %838 = vmatprep.subr.mxu0 0.0
    %839 = vmatpush2.msra.mxu0 %v780
    %840 = vmatprep.subr.mxu0 0.0
    %841 = vmatpush2.msra.mxu0 %v779
    %842 = vmatprep.subr.mxu0 0.0
    %843 = vmatpush2.msra.mxu0 %v778
    %844 = vmatprep.subr.mxu0 0.0
    %845 = vmatpush2.msra.mxu0 %v777
    %846 = vmatprep.subr.mxu0 0.0
    %847 = vmatpush2.msra.mxu0 %v776
    %848 = vmatprep.subr.mxu0 0.0
    %849 = vmatpush2.msra.mxu0 %v775
    %850 = vmatprep.subr.mxu0 0.0
    %851 = vmatpush2.msra.mxu0 %v774
    %852 = vmatprep.subr.mxu0 0.0
    %853 = vmatpush2.msra.mxu0 %v773
    %854 = vmatprep.subr.mxu0 0.0
    %855 = vmatpush2.msra.mxu0 %v772
    %856 = vmatprep.mubr.f32.mxu0 %v789
    %857 = vmatmul.mubr.f32.gmra.mxu0 %v788
    %v858 = vpop.f32.mrf.mxu0
    %v859 = vadd.f32 0.0, %v858
    %v860 = vpop.f32.mrf.mxu0
    %861 = vmatprep.mubr.f32.mxu0 %v791
    %862 = vmatmul.mubr.f32.gmra.mxu0 %v790
    %v863 = vpop.f32.mrf.mxu0
    %v864 = vadd.f32 0.0, %v863
    %v865 = vpop.f32.mrf.mxu0
    %866 = vdwg.mxu0
    %v867 = vmul.f32 %v859, 0.0625
    %v868 = vmul.f32 %v864, 0.0625
    %v869 = vmul.f32 %v756, %v756
    %v870 = vmul.f32 %v757, %v757
    %v871 = vmul.f32 %v758, %v758
    %v872 = vmul.f32 %v759, %v759
    %v873 = vmul.f32 %v760, %v760
    %v874 = vmul.f32 %v761, %v761
    %v875 = vmul.f32 %v762, %v762
    %v876 = vmul.f32 %v763, %v763
    %v877 = vmul.f32 %v764, %v764
    %v878 = vmul.f32 %v765, %v765
    %v879 = vmul.f32 %v766, %v766
    %v880 = vmul.f32 %v767, %v767
    %v881 = vmul.f32 %v768, %v768
    %v882 = vmul.f32 %v769, %v769
    %v883 = vmul.f32 %v770, %v770
    %v884 = vmul.f32 %v771, %v771
    %v885 = vmul.f32 %v772, %v772
    %v886 = vmul.f32 %v773, %v773
    %v887 = vmul.f32 %v774, %v774
    %v888 = vmul.f32 %v775, %v775
    %v889 = vmul.f32 %v776, %v776
    %v890 = vmul.f32 %v777, %v777
    %v891 = vmul.f32 %v778, %v778
    %v892 = vmul.f32 %v779, %v779
    %v893 = vmul.f32 %v780, %v780
    %v894 = vmul.f32 %v781, %v781
    %v895 = vmul.f32 %v782, %v782
    %v896 = vmul.f32 %v783, %v783
    %v897 = vmul.f32 %v784, %v784
    %v898 = vmul.f32 %v785, %v785
    %v899 = vmul.f32 %v786, %v786
    %v900 = vmul.f32 %v787, %v787
    %901 = vmatprep.subr.mxu0 0.0
    %902 = vmatpush1.msra.mxu0 %v884
    %903 = vmatprep.subr.mxu0 0.0
    %904 = vmatpush1.msra.mxu0 %v883
    %905 = vmatprep.subr.mxu0 0.0
    %906 = vmatpush1.msra.mxu0 %v882
    %907 = vmatprep.subr.mxu0 0.0
    %908 = vmatpush1.msra.mxu0 %v881
    %909 = vmatprep.subr.mxu0 0.0
    %910 = vmatpush1.msra.mxu0 %v880
    %911 = vmatprep.subr.mxu0 0.0
    %912 = vmatpush1.msra.mxu0 %v879
    %913 = vmatprep.subr.mxu0 0.0
    %914 = vmatpush1.msra.mxu0 %v878
    %915 = vmatprep.subr.mxu0 0.0
    %916 = vmatpush1.msra.mxu0 %v877
    %917 = vmatprep.subr.mxu0 0.0
    %918 = vmatpush1.msra.mxu0 %v876
    %919 = vmatprep.subr.mxu0 0.0
    %920 = vmatpush1.msra.mxu0 %v875
    %921 = vmatprep.subr.mxu0 0.0
    %922 = vmatpush1.msra.mxu0 %v874
    %923 = vmatprep.subr.mxu0 0.0
    %924 = vmatpush1.msra.mxu0 %v873
    %925 = vmatprep.subr.mxu0 0.0
    %926 = vmatpush1.msra.mxu0 %v872
    %927 = vmatprep.subr.mxu0 0.0
    %928 = vmatpush1.msra.mxu0 %v871
    %929 = vmatprep.subr.mxu0 0.0
    %930 = vmatpush1.msra.mxu0 %v870
    %931 = vmatprep.subr.mxu0 0.0
    %932 = vmatpush1.msra.mxu0 %v869
    %933 = vmatprep.subr.mxu0 0.0
    %934 = vmatpush2.msra.mxu0 %v900
    %935 = vmatprep.subr.mxu0 0.0
    %936 = vmatpush2.msra.mxu0 %v899
    %937 = vmatprep.subr.mxu0 0.0
    %938 = vmatpush2.msra.mxu0 %v898
    %939 = vmatprep.subr.mxu0 0.0
    %940 = vmatpush2.msra.mxu0 %v897
    %941 = vmatprep.subr.mxu0 0.0
    %942 = vmatpush2.msra.mxu0 %v896
    %943 = vmatprep.subr.mxu0 0.0
    %944 = vmatpush2.msra.mxu0 %v895
    %945 = vmatprep.subr.mxu0 0.0
    %946 = vmatpush2.msra.mxu0 %v894
    %947 = vmatprep.subr.mxu0 0.0
    %948 = vmatpush2.msra.mxu0 %v893
    %949 = vmatprep.subr.mxu0 0.0
    %950 = vmatpush2.msra.mxu0 %v892
    %951 = vmatprep.subr.mxu0 0.0
    %952 = vmatpush2.msra.mxu0 %v891
    %953 = vmatprep.subr.mxu0 0.0
    %954 = vmatpush2.msra.mxu0 %v890
    %955 = vmatprep.subr.mxu0 0.0
    %956 = vmatpush2.msra.mxu0 %v889
    %957 = vmatprep.subr.mxu0 0.0
    %958 = vmatpush2.msra.mxu0 %v888
    %959 = vmatprep.subr.mxu0 0.0
    %960 = vmatpush2.msra.mxu0 %v887
    %961 = vmatprep.subr.mxu0 0.0
    %962 = vmatpush2.msra.mxu0 %v886
    %963 = vmatprep.subr.mxu0 0.0
    %964 = vmatpush2.msra.mxu0 %v885
    %965 = vmatprep.mubr.f32.mxu0 %v789
    %966 = vmatmul.mubr.f32.gmra.mxu0 %v788
    %v967 = vpop.f32.mrf.mxu0
    %v968 = vadd.f32 0.0, %v967
    %v969 = vpop.f32.mrf.mxu0
    %970 = vmatprep.mubr.f32.mxu0 %v791
    %971 = vmatmul.mubr.f32.gmra.mxu0 %v790
    %v972 = vpop.f32.mrf.mxu0
    %v973 = vadd.f32 0.0, %v972
    %v974 = vpop.f32.mrf.mxu0
    %975 = vdwg.mxu0
    %v976 = vmul.f32 %v867, 16.0
    %v977 = vmul.f32 %v868, 16.0
    %v978 = vmul.f32 %v976, %v867
    %v979 = vmul.f32 %v977, %v868
    %v980 = vsub.f32 %v968, %v978
    %v981 = vsub.f32 %v973, %v979
    %v982 = vmul.f32 %v980, 0.06666667
    %v983 = vmul.f32 %v981, 0.06666667
    %v984 = vmax.f32 %v982, 0.0
    %v985 = vmax.f32 %v983, 0.0
    %v986 = vrsqrt.pop %v984
    %v987 = vmul.f32 %v984, %v986
    %vm988 = vcmp.eq.f32.partialorder %v984, inf
    %v989 = vsel %vm988, %v984, %v987
    %vm990 = vcmp.eq.f32.partialorder %v984, 0.0
    %v991 = vand.u32 %v984, 2147483648
    %v992 = vsel %vm990, %v991, %v989
    %v993 = vrsqrt.pop %v985
    %v994 = vmul.f32 %v985, %v993
    %vm995 = vcmp.eq.f32.partialorder %v985, inf
    %v996 = vsel %vm995, %v985, %v994
    %vm997 = vcmp.eq.f32.partialorder %v985, 0.0
    %v998 = vand.u32 %v985, 2147483648
    %v999 = vsel %vm997, %v998, %v996
    %v1000 = vld [vmem:[#allocation2 + $0x38] sm:$0xff]
    %v1001 = vld [vmem:[#allocation2 + $0x40] sm:$0xff]
    %v1002 = vld [vmem:[#allocation2 + $0x48] sm:$0xff]
    %v1003 = vld [vmem:[#allocation2 + $0x50] sm:$0xff]
    %v1004 = vld [vmem:[#allocation2 + $0x58] sm:$0xff]
    %v1005 = vld [vmem:[#allocation2 + $0x60] sm:$0xff]
    %v1006 = vld [vmem:[#allocation2 + $0x68] sm:$0xff]
    %v1007 = vld [vmem:[#allocation2 + $0x70] sm:$0xff]
    %v1008 = vld [vmem:[#allocation2 + $0x78] sm:$0xff]
    %v1009 = vld [vmem:[#allocation2 + $0x80] sm:$0xff]
    %v1010 = vld [vmem:[#allocation2 + $0x88] sm:$0xff]
    %v1011 = vld [vmem:[#allocation2 + $0x90] sm:$0xff]
    %v1012 = vld [vmem:[#allocation2 + $0x98] sm:$0xff]
    %v1013 = vld [vmem:[#allocation2 + $0xa0] sm:$0xff]
    %v1014 = vld [vmem:[#allocation2 + $0xa8] sm:$0xff]
    %v1015 = vld [vmem:[#allocation2 + $0xb0] sm:$0xff]
    %vm1016 = vcmask 523264
    %v1018 = vsel %vm1016, %v992, 0
    %v1021 = vsel %vm1016, %v999, 0
    %1023 = vmatprep.subr.mxu0 0.0
    %1024 = vmatpush1.msra.mxu0 0.0
    %1025 = vmatprep.subr.mxu0 0.0
    %1026 = vmatpush1.msra.mxu0 0.0
    %1027 = vmatprep.subr.mxu0 0.0
    %1028 = vmatpush1.msra.mxu0 0.0
    %1029 = vmatprep.subr.mxu0 0.0
    %1030 = vmatpush1.msra.mxu0 0.0
    %1031 = vmatprep.subr.mxu0 0.0
    %1032 = vmatpush1.msra.mxu0 0.0
    %1033 = vmatprep.subr.mxu0 0.0
    %1034 = vmatpush1.msra.mxu0 0.0
    %1035 = vmatprep.subr.mxu0 0.0
    %1036 = vmatpush1.msra.mxu0 0.0
    %1037 = vmatprep.subr.mxu0 0.0
    %1038 = vmatpush1.msra.mxu0 0.0
    %1039 = vmatprep.subr.mxu0 0.0
    %1040 = vmatpush1.msra.mxu0 %v1015
    %1041 = vmatprep.subr.mxu0 0.0
    %1042 = vmatpush1.msra.mxu0 %v1014
    %1043 = vmatprep.subr.mxu0 0.0
    %1044 = vmatpush1.msra.mxu0 %v1013
    %1045 = vmatprep.subr.mxu0 0.0
    %1046 = vmatpush1.msra.mxu0 %v1012
    %1047 = vmatprep.subr.mxu0 0.0
    %1048 = vmatpush1.msra.mxu0 %v1011
    %1049 = vmatprep.subr.mxu0 0.0
    %1050 = vmatpush1.msra.mxu0 %v1010
    %1051 = vmatprep.subr.mxu0 0.0
    %1052 = vmatpush1.msra.mxu0 %v1009
    %1053 = vmatprep.subr.mxu0 0.0
    %1054 = vmatpush1.msra.mxu0 %v1008
    %1055 = vmatprep.subr.mxu0 0.0
    %1056 = vmatpush2.msra.mxu0 0.0
    %1057 = vmatprep.subr.mxu0 0.0
    %1058 = vmatpush2.msra.mxu0 0.0
    %1059 = vmatprep.subr.mxu0 0.0
    %1060 = vmatpush2.msra.mxu0 0.0
    %1061 = vmatprep.subr.mxu0 0.0
    %1062 = vmatpush2.msra.mxu0 0.0
    %1063 = vmatprep.subr.mxu0 0.0
    %1064 = vmatpush2.msra.mxu0 0.0
    %1065 = vmatprep.subr.mxu0 0.0
    %1066 = vmatpush2.msra.mxu0 0.0
    %1067 = vmatprep.subr.mxu0 0.0
    %1068 = vmatpush2.msra.mxu0 0.0
    %1069 = vmatprep.subr.mxu0 0.0
    %1070 = vmatpush2.msra.mxu0 0.0
    %1071 = vmatprep.subr.mxu0 0.0
    %1072 = vmatpush2.msra.mxu0 0.0
    %1073 = vmatprep.subr.mxu0 0.0
    %1074 = vmatpush2.msra.mxu0 0.0
    %1075 = vmatprep.subr.mxu0 0.0
    %1076 = vmatpush2.msra.mxu0 0.0
    %1077 = vmatprep.subr.mxu0 0.0
    %1078 = vmatpush2.msra.mxu0 0.0
    %1079 = vmatprep.subr.mxu0 0.0
    %1080 = vmatpush2.msra.mxu0 0.0
    %1081 = vmatprep.subr.mxu0 0.0
    %1082 = vmatpush2.msra.mxu0 0.0
    %1083 = vmatprep.subr.mxu0 0.0
    %1084 = vmatpush2.msra.mxu0 0.0
    %1085 = vmatprep.subr.mxu0 0.0
    %1086 = vmatpush2.msra.mxu0 0.0
    %1087 = vmatprep.mubr.f32.mxu0 0.0
    %1088 = vmatmul.mubr.f32.gmra.mxu0 %v1018
    %v1089 = vpop.f32.mrf.mxu0
    %v1090 = vadd.f32 0.0, %v1089
    %v1091 = vpop.f32.mrf.mxu0
    %1092 = vmatprep.mubr.f32.mxu0 0.0
    %1093 = vmatmul.mubr.f32.gmra.mxu0 %v1021
    %v1094 = vpop.f32.mrf.mxu0
    %v1095 = vadd.f32 0.0, %v1094
    %v1096 = vpop.f32.mrf.mxu0
    %1097 = vdwg.mxu0
    %v1099 = vsel %vm1016, %v867, 0
    %v1102 = vsel %vm1016, %v868, 0
    %1104 = vmatprep.subr.mxu0 0.0
    %1105 = vmatpush1.msra.mxu0 0.0
    %1106 = vmatprep.subr.mxu0 0.0
    %1107 = vmatpush1.msra.mxu0 0.0
    %1108 = vmatprep.subr.mxu0 0.0
    %1109 = vmatpush1.msra.mxu0 0.0
    %1110 = vmatprep.subr.mxu0 0.0
    %1111 = vmatpush1.msra.mxu0 0.0
    %1112 = vmatprep.subr.mxu0 0.0
    %1113 = vmatpush1.msra.mxu0 0.0
    %1114 = vmatprep.subr.mxu0 0.0
    %1115 = vmatpush1.msra.mxu0 0.0
    %1116 = vmatprep.subr.mxu0 0.0
    %1117 = vmatpush1.msra.mxu0 0.0
    %1118 = vmatprep.subr.mxu0 0.0
    %1119 = vmatpush1.msra.mxu0 0.0
    %1120 = vmatprep.subr.mxu0 0.0
    %1121 = vmatpush1.msra.mxu0 %v1007
    %1122 = vmatprep.subr.mxu0 0.0
    %1123 = vmatpush1.msra.mxu0 %v1006
    %1124 = vmatprep.subr.mxu0 0.0
    %1125 = vmatpush1.msra.mxu0 %v1005
    %1126 = vmatprep.subr.mxu0 0.0
    %1127 = vmatpush1.msra.mxu0 %v1004
    %1128 = vmatprep.subr.mxu0 0.0
    %1129 = vmatpush1.msra.mxu0 %v1003
    %1130 = vmatprep.subr.mxu0 0.0
    %1131 = vmatpush1.msra.mxu0 %v1002
    %1132 = vmatprep.subr.mxu0 0.0
    %1133 = vmatpush1.msra.mxu0 %v1001
    %1134 = vmatprep.subr.mxu0 0.0
    %1135 = vmatpush1.msra.mxu0 %v1000
    %1136 = vmatprep.subr.mxu0 0.0
    %1137 = vmatpush2.msra.mxu0 0.0
    %1138 = vmatprep.subr.mxu0 0.0
    %1139 = vmatpush2.msra.mxu0 0.0
    %1140 = vmatprep.subr.mxu0 0.0
    %1141 = vmatpush2.msra.mxu0 0.0
    %1142 = vmatprep.subr.mxu0 0.0
    %1143 = vmatpush2.msra.mxu0 0.0
    %1144 = vmatprep.subr.mxu0 0.0
    %1145 = vmatpush2.msra.mxu0 0.0
    %1146 = vmatprep.subr.mxu0 0.0
    %1147 = vmatpush2.msra.mxu0 0.0
    %1148 = vmatprep.subr.mxu0 0.0
    %1149 = vmatpush2.msra.mxu0 0.0
    %1150 = vmatprep.subr.mxu0 0.0
    %1151 = vmatpush2.msra.mxu0 0.0
    %1152 = vmatprep.subr.mxu0 0.0
    %1153 = vmatpush2.msra.mxu0 0.0
    %1154 = vmatprep.subr.mxu0 0.0
    %1155 = vmatpush2.msra.mxu0 0.0
    %1156 = vmatprep.subr.mxu0 0.0
    %1157 = vmatpush2.msra.mxu0 0.0
    %1158 = vmatprep.subr.mxu0 0.0
    %1159 = vmatpush2.msra.mxu0 0.0
    %1160 = vmatprep.subr.mxu0 0.0
    %1161 = vmatpush2.msra.mxu0 0.0
    %1162 = vmatprep.subr.mxu0 0.0
    %1163 = vmatpush2.msra.mxu0 0.0
    %1164 = vmatprep.subr.mxu0 0.0
    %1165 = vmatpush2.msra.mxu0 0.0
    %1166 = vmatprep.subr.mxu0 0.0
    %1167 = vmatpush2.msra.mxu0 0.0
    %1168 = vmatprep.mubr.f32.mxu0 0.0
    %1169 = vmatmul.mubr.f32.gmra.mxu0 %v1099
    %v1170 = vpop.f32.mrf.mxu0
    %v1171 = vadd.f32 %v1090, %v1170
    %v1172 = vpop.f32.mrf.mxu0
    %1173 = vmatprep.mubr.f32.mxu0 0.0
    %1174 = vmatmul.mubr.f32.gmra.mxu0 %v1102
    %v1175 = vpop.f32.mrf.mxu0
    %v1176 = vadd.f32 %v1095, %v1175
    %v1177 = vpop.f32.mrf.mxu0
    %1178 = vdwg.mxu0
    %v1179 = vld [vmem:[#allocation2 + $0xb8] sm:$0x1]
    %v1180 = vlaneseq
    %v1181 = vshrl.u32 %v1180, 7
    %v1182 = vsub.s32 0, %v1181
    %v1183 = vrot.slane %v1179, %v1182
    %v1184 = vadd.f32 %v1171, %v1183
    %v1185 = vadd.f32 %v1176, %v1183
    %v1186 = vmax.f32 %v1184, 0.0
    %v1187 = vmax.f32 %v1185, 0.0
    %v1188 = vld [vmem:[#allocation2 + $0xc0] sm:$0xff]
    %v1189 = vld [vmem:[#allocation2 + $0xc8] sm:$0xff]
    %v1190 = vadd.f32 %v1186, %v1188
    %v1191 = vadd.f32 %v1187, %v1189
    %v1192 = vld [vmem:[%s2 + $0x20] sm:$0xff]
    %v1193 = vld [vmem:[%s2 + $0x28] sm:$0xff]
    %v1194 = vld [vmem:[%s2 + $0x30] sm:$0xff]
    %v1195 = vld [vmem:[%s2 + $0x38] sm:$0xff]
    %v1196 = vld [vmem:[%s2 + $0x40] sm:$0xff]
    %v1197 = vld [vmem:[%s2 + $0x48] sm:$0xff]
    %v1198 = vld [vmem:[%s2 + $0x50] sm:$0xff]
    %v1199 = vld [vmem:[%s2 + $0x58] sm:$0xff]
    %v1200 = vld [vmem:[%s2 + $0x60] sm:$0xff]
    %v1201 = vld [vmem:[%s2 + $0x68] sm:$0xff]
    %v1202 = vld [vmem:[%s2 + $0x70] sm:$0xff]
    %v1203 = vld [vmem:[%s2 + $0x78] sm:$0xff]
    %v1204 = vld [vmem:[%s2 + $0x80] sm:$0xff]
    %v1205 = vld [vmem:[%s2 + $0x88] sm:$0xff]
    %v1206 = vld [vmem:[%s2 + $0x90] sm:$0xff]
    %v1207 = vld [vmem:[%s2 + $0x98] sm:$0xff]
    %v1208 = vld [vmem:[%s2 + $0xa0] sm:$0xff]
    %v1209 = vld [vmem:[%s2 + $0xa8] sm:$0xff]
    %v1210 = vld [vmem:[%s2 + $0xb0] sm:$0xff]
    %v1211 = vld [vmem:[%s2 + $0xb8] sm:$0xff]
    %v1212 = vld [vmem:[%s2 + $0xc0] sm:$0xff]
    %v1213 = vld [vmem:[%s2 + $0xc8] sm:$0xff]
    %v1214 = vld [vmem:[%s2 + $0xd0] sm:$0xff]
    %v1215 = vld [vmem:[%s2 + $0xd8] sm:$0xff]
    %v1216 = vld [vmem:[%s2 + $0xe0] sm:$0xff]
    %v1217 = vld [vmem:[%s2 + $0xe8] sm:$0xff]
    %v1218 = vld [vmem:[%s2 + $0xf0] sm:$0xff]
    %v1219 = vld [vmem:[%s2 + $0xf8] sm:$0xff]
    %v1220 = vld [vmem:[%s2 + $0x100] sm:$0xff]
    %v1221 = vld [vmem:[%s2 + $0x108] sm:$0xff]
    %v1222 = vld [vmem:[%s2 + $0x110] sm:$0xff]
    %v1223 = vld [vmem:[%s2 + $0x118] sm:$0xff]
    %s1224 = scalar_lea.vmem %s2, 288
    %v1225 = vld [vmem:[%s1224] ss:$8 sm:$0x3]
    %v1227 = vlaneseq
    %v1228 = vshrl.u32 %v1227, 7
    %v1229 = vsub.s32 0, %v1228
    %v1230 = vrot.slane %v1225, %v1229
    %v1231 = vlaneseq
    %v1232 = vshrl.u32 %v1231, 7
    %v1233 = vsub.s32 1, %v1232
    %v1234 = vrot.slane %v1225, %v1233
    %1237 = vmatprep.subr.mxu0 %v1223
    %1238 = vmatpush1.msra.mxu0 %v1222
    %1239 = vmatprep.subr.mxu0 %v1221
    %1240 = vmatpush1.msra.mxu0 %v1220
    %1241 = vmatprep.subr.mxu0 %v1219
    %1242 = vmatpush1.msra.mxu0 %v1218
    %1243 = vmatprep.subr.mxu0 %v1217
    %1244 = vmatpush1.msra.mxu0 %v1216
    %1245 = vmatprep.subr.mxu0 %v1215
    %1246 = vmatpush1.msra.mxu0 %v1214
    %1247 = vmatprep.subr.mxu0 %v1213
    %1248 = vmatpush1.msra.mxu0 %v1212
    %1249 = vmatprep.subr.mxu0 %v1211
    %1250 = vmatpush1.msra.mxu0 %v1210
    %1251 = vmatprep.subr.mxu0 %v1209
    %1252 = vmatpush1.msra.mxu0 %v1208
    %1253 = vmatprep.subr.mxu0 %v1207
    %1254 = vmatpush1.msra.mxu0 %v1206
    %1255 = vmatprep.subr.mxu0 %v1205
    %1256 = vmatpush1.msra.mxu0 %v1204
    %1257 = vmatprep.subr.mxu0 %v1203
    %1258 = vmatpush1.msra.mxu0 %v1202
    %1259 = vmatprep.subr.mxu0 %v1201
    %1260 = vmatpush1.msra.mxu0 %v1200
    %1261 = vmatprep.subr.mxu0 %v1199
    %1262 = vmatpush1.msra.mxu0 %v1198
    %1263 = vmatprep.subr.mxu0 %v1197
    %1264 = vmatpush1.msra.mxu0 %v1196
    %1265 = vmatprep.subr.mxu0 %v1195
    %1266 = vmatpush1.msra.mxu0 %v1194
    %1267 = vmatprep.subr.mxu0 %v1193
    %1268 = vmatpush1.msra.mxu0 %v1192
    %1269 = vmatprep.subr.mxu0 0.0
    %1270 = vmatpush2.msra.mxu0 0.0
    %1271 = vmatprep.subr.mxu0 0.0
    %1272 = vmatpush2.msra.mxu0 0.0
    %1273 = vmatprep.subr.mxu0 0.0
    %1274 = vmatpush2.msra.mxu0 0.0
    %1275 = vmatprep.subr.mxu0 0.0
    %1276 = vmatpush2.msra.mxu0 0.0
    %1277 = vmatprep.subr.mxu0 0.0
    %1278 = vmatpush2.msra.mxu0 0.0
    %1279 = vmatprep.subr.mxu0 0.0
    %1280 = vmatpush2.msra.mxu0 0.0
    %1281 = vmatprep.subr.mxu0 0.0
    %1282 = vmatpush2.msra.mxu0 0.0
    %1283 = vmatprep.subr.mxu0 0.0
    %1284 = vmatpush2.msra.mxu0 0.0
    %1285 = vmatprep.subr.mxu0 0.0
    %1286 = vmatpush2.msra.mxu0 0.0
    %1287 = vmatprep.subr.mxu0 0.0
    %1288 = vmatpush2.msra.mxu0 0.0
    %1289 = vmatprep.subr.mxu0 0.0
    %1290 = vmatpush2.msra.mxu0 0.0
    %1291 = vmatprep.subr.mxu0 0.0
    %1292 = vmatpush2.msra.mxu0 0.0
    %1293 = vmatprep.subr.mxu0 0.0
    %1294 = vmatpush2.msra.mxu0 0.0
    %1295 = vmatprep.subr.mxu0 0.0
    %1296 = vmatpush2.msra.mxu0 0.0
    %1297 = vmatprep.subr.mxu0 0.0
    %1298 = vmatpush2.msra.mxu0 0.0
    %1299 = vmatprep.subr.mxu0 0.0
    %1300 = vmatpush2.msra.mxu0 0.0
    %1301 = vmatprep.mubr.f32.mxu0 0.0
    %1302 = vmatmul.mubr.f32.gmra.mxu0 %v1190
    %v1303 = vpop.f32.mrf.mxu0
    %v1304 = vadd.f32 %v1230, %v1303
    %v1305 = vpop.f32.mrf.mxu0
    %v1306 = vadd.f32 %v1234, %v1305
    %1307 = vmatprep.mubr.f32.mxu0 0.0
    %1308 = vmatmul.mubr.f32.gmra.mxu0 %v1191
    %v1309 = vpop.f32.mrf.mxu0
    %v1310 = vadd.f32 %v1230, %v1309
    %v1311 = vpop.f32.mrf.mxu0
    %v1312 = vadd.f32 %v1234, %v1311
    %1313 = vdwg.mxu0
    %v1314 = vld [vmem:[#allocation2 + $0xd0] sm:$0xf]
    %v1315 = vrot.slane %v1304, 4
    %v1316 = vadd.f32 %v1304, %v1315
    %v1317 = vrot.slane %v1316, 2
    %v1318 = vadd.f32 %v1316, %v1317
    %v1319 = vrot.slane %v1318, 1
    %v1320 = vadd.f32 %v1318, %v1319
    %v1321 = vrcp.pop 8.0
    %v1322 = vmul.f32 %v1320, %v1321
    %v1323 = vmul.f32 %v1306, %v1322
    %1324 = vmatprep.subr.mxu0 0.0
    %1325 = vmatpush1.xpose.msra.mxu0 0.0
    %1326 = vmatprep.subr.mxu0 0.0
    %1327 = vmatpush1.xpose.msra.mxu0 0.0
    %1328 = vmatprep.subr.mxu0 0.0
    %1329 = vmatpush1.xpose.msra.mxu0 0.0
    %1330 = vmatprep.subr.mxu0 0.0
    %1331 = vmatpush1.xpose.msra.mxu0 0.0
    %1332 = vmatprep.subr.mxu0 0.0
    %1333 = vmatpush1.xpose.msra.mxu0 0.0
    %1334 = vmatprep.subr.mxu0 0.0
    %1335 = vmatpush1.xpose.msra.mxu0 0.0
    %1336 = vmatprep.subr.mxu0 0.0
    %1337 = vmatpush1.xpose.msra.mxu0 0.0
    %1338 = vmatprep.subr.mxu0 0.0
    %1339 = vmatpush1.xpose.msra.mxu0 0.0
    %1340 = vmatprep.subr.mxu0 0.0
    %1341 = vmatpush1.xpose.msra.mxu0 0.0
    %1342 = vmatprep.subr.mxu0 0.0
    %1343 = vmatpush1.xpose.msra.mxu0 0.0
    %1344 = vmatprep.subr.mxu0 0.0
    %1345 = vmatpush1.xpose.msra.mxu0 0.0
    %1346 = vmatprep.subr.mxu0 0.0
    %1347 = vmatpush1.xpose.msra.mxu0 0.0
    %1348 = vmatprep.subr.mxu0 0.0
    %1349 = vmatpush1.xpose.msra.mxu0 0.0
    %1350 = vmatprep.subr.mxu0 0.0
    %1351 = vmatpush1.xpose.msra.mxu0 0.0
    %1352 = vmatprep.subr.mxu0 0.0
    %1353 = vmatpush1.xpose.msra.mxu0 0.0
    %1354 = vmatprep.subr.mxu0 0.0
    %1355 = vmatpush1.xpose.msra.mxu0 %v1314
    %1356 = vmatprep.subr.mxu0 0.0
    %1357 = vmatpush2.xpose.msra.mxu0 0.0
    %1358 = vmatprep.subr.mxu0 0.0
    %1359 = vmatpush2.xpose.msra.mxu0 0.0
    %1360 = vmatprep.subr.mxu0 0.0
    %1361 = vmatpush2.xpose.msra.mxu0 0.0
    %1362 = vmatprep.subr.mxu0 0.0
    %1363 = vmatpush2.xpose.msra.mxu0 0.0
    %1364 = vmatprep.subr.mxu0 0.0
    %1365 = vmatpush2.xpose.msra.mxu0 0.0
    %1366 = vmatprep.subr.mxu0 0.0
    %1367 = vmatpush2.xpose.msra.mxu0 0.0
    %1368 = vmatprep.subr.mxu0 0.0
    %1369 = vmatpush2.xpose.msra.mxu0 0.0
    %1370 = vmatprep.subr.mxu0 0.0
    %1371 = vmatpush2.xpose.msra.mxu0 0.0
    %1372 = vmatprep.subr.mxu0 0.0
    %1373 = vmatpush2.xpose.msra.mxu0 0.0
    %1374 = vmatprep.subr.mxu0 0.0
    %1375 = vmatpush2.xpose.msra.mxu0 0.0
    %1376 = vmatprep.subr.mxu0 0.0
    %1377 = vmatpush2.xpose.msra.mxu0 0.0
    %1378 = vmatprep.subr.mxu0 0.0
    %1379 = vmatpush2.xpose.msra.mxu0 0.0
    %1380 = vmatprep.subr.mxu0 0.0
    %1381 = vmatpush2.xpose.msra.mxu0 0.0
    %1382 = vmatprep.subr.mxu0 0.0
    %1383 = vmatpush2.xpose.msra.mxu0 0.0
    %1384 = vmatprep.subr.mxu0 0.0
    %1385 = vmatpush2.xpose.msra.mxu0 0.0
    %1386 = vmatprep.subr.mxu0 0.0
    %1387 = vmatpush2.xpose.msra.mxu0 0.0
    %1388 = vmatprep.mubr.f32.mxu0 0.0
    %1389 = vmatmul.mubr.f32.gmra.mxu0 %v1323
    %v1390 = vpop.f32.mrf.mxu0
    %v1391 = vadd.f32 0.0, %v1390
    %v1392 = vpop.f32.mrf.mxu0
    %1393 = vdwg.mxu0
    %v1394 = vmul.f32 %v1391, 0.17677669
    %v1395 = vsel %vm67, %v1394, -inf
    %v1396 = vrot.slane %v1395, 4
    %v1397 = vmax.f32 %v1395, %v1396
    %v1398 = vrot.slane %v1397, 2
    %v1399 = vmax.f32 %v1397, %v1398
    %v1400 = vrot.slane %v1399, 1
    %v1401 = vmax.f32 %v1399, %v1400
    %v1402 = vsub.f32 %v1394, %v1401
    %v1403 = vmul.f32 %v1402, 1.442695
    %v1404 = vpow.pop %v1403
    %v1405 = vsel %vm67, %v1404, 0.0
    %v1406 = vrot.slane %v1405, 4
    %v1407 = vadd.f32 %v1405, %v1406
    %v1408 = vrot.slane %v1407, 2
    %v1409 = vadd.f32 %v1407, %v1408
    %v1410 = vrot.slane %v1409, 1
    %v1411 = vadd.f32 %v1409, %v1410
    %v1412 = vrcp.pop %v1411
    %v1413 = vmul.f32 %v1404, %v1412
    %v1415 = vsel %vm67, %v1413, 0
    %v1418 = vsel %vm164, %v1314, 0
    %1420 = vmatprep.subr.mxu0 0.0
    %1421 = vmatpush1.msra.mxu0 0.0
    %1422 = vmatprep.subr.mxu0 0.0
    %1423 = vmatpush1.msra.mxu0 0.0
    %1424 = vmatprep.subr.mxu0 0.0
    %1425 = vmatpush1.msra.mxu0 0.0
    %1426 = vmatprep.subr.mxu0 0.0
    %1427 = vmatpush1.msra.mxu0 0.0
    %1428 = vmatprep.subr.mxu0 0.0
    %1429 = vmatpush1.msra.mxu0 0.0
    %1430 = vmatprep.subr.mxu0 0.0
    %1431 = vmatpush1.msra.mxu0 0.0
    %1432 = vmatprep.subr.mxu0 0.0
    %1433 = vmatpush1.msra.mxu0 0.0
    %1434 = vmatprep.subr.mxu0 0.0
    %1435 = vmatpush1.msra.mxu0 0.0
    %1436 = vmatprep.subr.mxu0 0.0
    %1437 = vmatpush1.msra.mxu0 0.0
    %1438 = vmatprep.subr.mxu0 0.0
    %1439 = vmatpush1.msra.mxu0 0.0
    %1440 = vmatprep.subr.mxu0 0.0
    %1441 = vmatpush1.msra.mxu0 0.0
    %1442 = vmatprep.subr.mxu0 0.0
    %1443 = vmatpush1.msra.mxu0 0.0
    %1444 = vmatprep.subr.mxu0 0.0
    %1445 = vmatpush1.msra.mxu0 0.0
    %1446 = vmatprep.subr.mxu0 0.0
    %1447 = vmatpush1.msra.mxu0 0.0
    %1448 = vmatprep.subr.mxu0 0.0
    %1449 = vmatpush1.msra.mxu0 0.0
    %1450 = vmatprep.subr.mxu0 0.0
    %1451 = vmatpush1.msra.mxu0 %v1418
    %1452 = vmatprep.subr.mxu0 0.0
    %1453 = vmatpush2.msra.mxu0 0.0
    %1454 = vmatprep.subr.mxu0 0.0
    %1455 = vmatpush2.msra.mxu0 0.0
    %1456 = vmatprep.subr.mxu0 0.0
    %1457 = vmatpush2.msra.mxu0 0.0
    %1458 = vmatprep.subr.mxu0 0.0
    %1459 = vmatpush2.msra.mxu0 0.0
    %1460 = vmatprep.subr.mxu0 0.0
    %1461 = vmatpush2.msra.mxu0 0.0
    %1462 = vmatprep.subr.mxu0 0.0
    %1463 = vmatpush2.msra.mxu0 0.0
    %1464 = vmatprep.subr.mxu0 0.0
    %1465 = vmatpush2.msra.mxu0 0.0
    %1466 = vmatprep.subr.mxu0 0.0
    %1467 = vmatpush2.msra.mxu0 0.0
    %1468 = vmatprep.subr.mxu0 0.0
    %1469 = vmatpush2.msra.mxu0 0.0
    %1470 = vmatprep.subr.mxu0 0.0
    %1471 = vmatpush2.msra.mxu0 0.0
    %1472 = vmatprep.subr.mxu0 0.0
    %1473 = vmatpush2.msra.mxu0 0.0
    %1474 = vmatprep.subr.mxu0 0.0
    %1475 = vmatpush2.msra.mxu0 0.0
    %1476 = vmatprep.subr.mxu0 0.0
    %1477 = vmatpush2.msra.mxu0 0.0
    %1478 = vmatprep.subr.mxu0 0.0
    %1479 = vmatpush2.msra.mxu0 0.0
    %1480 = vmatprep.subr.mxu0 0.0
    %1481 = vmatpush2.msra.mxu0 0.0
    %1482 = vmatprep.subr.mxu0 0.0
    %1483 = vmatpush2.msra.mxu0 0.0
    %1484 = vmatprep.mubr.f32.mxu0 0.0
    %1485 = vmatmul.mubr.f32.gmra.mxu0 %v1415
    %v1486 = vpop.f32.mrf.mxu0
    %v1487 = vadd.f32 0.0, %v1486
    %v1488 = vpop.f32.mrf.mxu0
    %1489 = vdwg.mxu0
    %v1490 = vmul.f32 %v1487, %v1190
    %v1491 = vrot.slane %v1490, 4
    %v1492 = vadd.f32 %v1490, %v1491
    %v1493 = vrot.slane %v1492, 2
    %v1494 = vadd.f32 %v1492, %v1493
    %v1495 = vrot.slane %v1494, 1
    %v1496 = vadd.f32 %v1494, %v1495
    %v1497 = vrot.slane %v1310, 4
    %v1498 = vadd.f32 %v1310, %v1497
    %v1499 = vrot.slane %v1498, 2
    %v1500 = vadd.f32 %v1498, %v1499
    %v1501 = vrot.slane %v1500, 1
    %v1502 = vadd.f32 %v1500, %v1501
    %v1503 = vmul.f32 %v1502, %v1321
    %v1504 = vmul.f32 %v1312, %v1503
    %1505 = vmatprep.subr.mxu0 0.0
    %1506 = vmatpush1.xpose.msra.mxu0 0.0
    %1507 = vmatprep.subr.mxu0 0.0
    %1508 = vmatpush1.xpose.msra.mxu0 0.0
    %1509 = vmatprep.subr.mxu0 0.0
    %1510 = vmatpush1.xpose.msra.mxu0 0.0
    %1511 = vmatprep.subr.mxu0 0.0
    %1512 = vmatpush1.xpose.msra.mxu0 0.0
    %1513 = vmatprep.subr.mxu0 0.0
    %1514 = vmatpush1.xpose.msra.mxu0 0.0
    %1515 = vmatprep.subr.mxu0 0.0
    %1516 = vmatpush1.xpose.msra.mxu0 0.0
    %1517 = vmatprep.subr.mxu0 0.0
    %1518 = vmatpush1.xpose.msra.mxu0 0.0
    %1519 = vmatprep.subr.mxu0 0.0
    %1520 = vmatpush1.xpose.msra.mxu0 0.0
    %1521 = vmatprep.subr.mxu0 0.0
    %1522 = vmatpush1.xpose.msra.mxu0 0.0
    %1523 = vmatprep.subr.mxu0 0.0
    %1524 = vmatpush1.xpose.msra.mxu0 0.0
    %1525 = vmatprep.subr.mxu0 0.0
    %1526 = vmatpush1.xpose.msra.mxu0 0.0
    %1527 = vmatprep.subr.mxu0 0.0
    %1528 = vmatpush1.xpose.msra.mxu0 0.0
    %1529 = vmatprep.subr.mxu0 0.0
    %1530 = vmatpush1.xpose.msra.mxu0 0.0
    %1531 = vmatprep.subr.mxu0 0.0
    %1532 = vmatpush1.xpose.msra.mxu0 0.0
    %1533 = vmatprep.subr.mxu0 0.0
    %1534 = vmatpush1.xpose.msra.mxu0 0.0
    %1535 = vmatprep.subr.mxu0 0.0
    %1536 = vmatpush1.xpose.msra.mxu0 %v1314
    %1537 = vmatprep.subr.mxu0 0.0
    %1538 = vmatpush2.xpose.msra.mxu0 0.0
    %1539 = vmatprep.subr.mxu0 0.0
    %1540 = vmatpush2.xpose.msra.mxu0 0.0
    %1541 = vmatprep.subr.mxu0 0.0
    %1542 = vmatpush2.xpose.msra.mxu0 0.0
    %1543 = vmatprep.subr.mxu0 0.0
    %1544 = vmatpush2.xpose.msra.mxu0 0.0
    %1545 = vmatprep.subr.mxu0 0.0
    %1546 = vmatpush2.xpose.msra.mxu0 0.0
    %1547 = vmatprep.subr.mxu0 0.0
    %1548 = vmatpush2.xpose.msra.mxu0 0.0
    %1549 = vmatprep.subr.mxu0 0.0
    %1550 = vmatpush2.xpose.msra.mxu0 0.0
    %1551 = vmatprep.subr.mxu0 0.0
    %1552 = vmatpush2.xpose.msra.mxu0 0.0
    %1553 = vmatprep.subr.mxu0 0.0
    %1554 = vmatpush2.xpose.msra.mxu0 0.0
    %1555 = vmatprep.subr.mxu0 0.0
    %1556 = vmatpush2.xpose.msra.mxu0 0.0
    %1557 = vmatprep.subr.mxu0 0.0
    %1558 = vmatpush2.xpose.msra.mxu0 0.0
    %1559 = vmatprep.subr.mxu0 0.0
    %1560 = vmatpush2.xpose.msra.mxu0 0.0
    %1561 = vmatprep.subr.mxu0 0.0
    %1562 = vmatpush2.xpose.msra.mxu0 0.0
    %1563 = vmatprep.subr.mxu0 0.0
    %1564 = vmatpush2.xpose.msra.mxu0 0.0
    %1565 = vmatprep.subr.mxu0 0.0
    %1566 = vmatpush2.xpose.msra.mxu0 0.0
    %1567 = vmatprep.subr.mxu0 0.0
    %1568 = vmatpush2.xpose.msra.mxu0 0.0
    %1569 = vmatprep.mubr.f32.mxu0 0.0
    %1570 = vmatmul.mubr.f32.gmra.mxu0 %v1504
    %v1571 = vpop.f32.mrf.mxu0
    %v1572 = vadd.f32 0.0, %v1571
    %v1573 = vpop.f32.mrf.mxu0
    %1574 = vdwg.mxu0
    %v1575 = vmul.f32 %v1572, 0.17677669
    %v1576 = vsel %vm67, %v1575, -inf
    %v1577 = vrot.slane %v1576, 4
    %v1578 = vmax.f32 %v1576, %v1577
    %v1579 = vrot.slane %v1578, 2
    %v1580 = vmax.f32 %v1578, %v1579
    %v1581 = vrot.slane %v1580, 1
    %v1582 = vmax.f32 %v1580, %v1581
    %v1583 = vsub.f32 %v1575, %v1582
    %v1584 = vmul.f32 %v1583, 1.442695
    %v1585 = vpow.pop %v1584
    %v1586 = vsel %vm67, %v1585, 0.0
    %v1587 = vrot.slane %v1586, 4
    %v1588 = vadd.f32 %v1586, %v1587
    %v1589 = vrot.slane %v1588, 2
    %v1590 = vadd.f32 %v1588, %v1589
    %v1591 = vrot.slane %v1590, 1
    %v1592 = vadd.f32 %v1590, %v1591
    %v1593 = vrcp.pop %v1592
    %v1594 = vmul.f32 %v1585, %v1593
    %v1596 = vsel %vm67, %v1594, 0
    %1598 = vmatprep.subr.mxu0 0.0
    %1599 = vmatpush1.msra.mxu0 0.0
    %1600 = vmatprep.subr.mxu0 0.0
    %1601 = vmatpush1.msra.mxu0 0.0
    %1602 = vmatprep.subr.mxu0 0.0
    %1603 = vmatpush1.msra.mxu0 0.0
    %1604 = vmatprep.subr.mxu0 0.0
    %1605 = vmatpush1.msra.mxu0 0.0
    %1606 = vmatprep.subr.mxu0 0.0
    %1607 = vmatpush1.msra.mxu0 0.0
    %1608 = vmatprep.subr.mxu0 0.0
    %1609 = vmatpush1.msra.mxu0 0.0
    %1610 = vmatprep.subr.mxu0 0.0
    %1611 = vmatpush1.msra.mxu0 0.0
    %1612 = vmatprep.subr.mxu0 0.0
    %1613 = vmatpush1.msra.mxu0 0.0
    %1614 = vmatprep.subr.mxu0 0.0
    %1615 = vmatpush1.msra.mxu0 0.0
    %1616 = vmatprep.subr.mxu0 0.0
    %1617 = vmatpush1.msra.mxu0 0.0
    %1618 = vmatprep.subr.mxu0 0.0
    %1619 = vmatpush1.msra.mxu0 0.0
    %1620 = vmatprep.subr.mxu0 0.0
    %1621 = vmatpush1.msra.mxu0 0.0
    %1622 = vmatprep.subr.mxu0 0.0
    %1623 = vmatpush1.msra.mxu0 0.0
    %1624 = vmatprep.subr.mxu0 0.0
    %1625 = vmatpush1.msra.mxu0 0.0
    %1626 = vmatprep.subr.mxu0 0.0
    %1627 = vmatpush1.msra.mxu0 0.0
    %1628 = vmatprep.subr.mxu0 0.0
    %1629 = vmatpush1.msra.mxu0 %v1418
    %1630 = vmatprep.subr.mxu0 0.0
    %1631 = vmatpush2.msra.mxu0 0.0
    %1632 = vmatprep.subr.mxu0 0.0
    %1633 = vmatpush2.msra.mxu0 0.0
    %1634 = vmatprep.subr.mxu0 0.0
    %1635 = vmatpush2.msra.mxu0 0.0
    %1636 = vmatprep.subr.mxu0 0.0
    %1637 = vmatpush2.msra.mxu0 0.0
    %1638 = vmatprep.subr.mxu0 0.0
    %1639 = vmatpush2.msra.mxu0 0.0
    %1640 = vmatprep.subr.mxu0 0.0
    %1641 = vmatpush2.msra.mxu0 0.0
    %1642 = vmatprep.subr.mxu0 0.0
    %1643 = vmatpush2.msra.mxu0 0.0
    %1644 = vmatprep.subr.mxu0 0.0
    %1645 = vmatpush2.msra.mxu0 0.0
    %1646 = vmatprep.subr.mxu0 0.0
    %1647 = vmatpush2.msra.mxu0 0.0
    %1648 = vmatprep.subr.mxu0 0.0
    %1649 = vmatpush2.msra.mxu0 0.0
    %1650 = vmatprep.subr.mxu0 0.0
    %1651 = vmatpush2.msra.mxu0 0.0
    %1652 = vmatprep.subr.mxu0 0.0
    %1653 = vmatpush2.msra.mxu0 0.0
    %1654 = vmatprep.subr.mxu0 0.0
    %1655 = vmatpush2.msra.mxu0 0.0
    %1656 = vmatprep.subr.mxu0 0.0
    %1657 = vmatpush2.msra.mxu0 0.0
    %1658 = vmatprep.subr.mxu0 0.0
    %1659 = vmatpush2.msra.mxu0 0.0
    %1660 = vmatprep.subr.mxu0 0.0
    %1661 = vmatpush2.msra.mxu0 0.0
    %1662 = vmatprep.mubr.f32.mxu0 0.0
    %1663 = vmatmul.mubr.f32.gmra.mxu0 %v1596
    %v1664 = vpop.f32.mrf.mxu0
    %v1665 = vadd.f32 0.0, %v1664
    %v1666 = vpop.f32.mrf.mxu0
    %1667 = vdwg.mxu0
    %v1668 = vmul.f32 %v1665, %v1191
    %v1669 = vrot.slane %v1668, 4
    %v1670 = vadd.f32 %v1668, %v1669
    %v1671 = vrot.slane %v1670, 2
    %v1672 = vadd.f32 %v1670, %v1671
    %v1673 = vrot.slane %v1672, 1
    %v1674 = vadd.f32 %v1672, %v1673
    %vm1675 = vcmask 1040384
    %v1676 = vsel %vm1675, %v1496, %v1674
    %v1677 = vld [vmem:[#allocation2 + $0xd8] sm:$0xff]
    %v1678 = vld [vmem:[#allocation2 + $0xe0] sm:$0xff]
    %v1679 = vld [vmem:[#allocation2 + $0xe8] sm:$0xff]
    %v1680 = vld [vmem:[#allocation2 + $0xf0] sm:$0xff]
    %v1681 = vld [vmem:[#allocation2 + $0xf8] sm:$0xff]
    %v1682 = vld [vmem:[#allocation2 + $0x100] sm:$0xff]
    %v1683 = vld [vmem:[#allocation2 + $0x108] sm:$0xff]
    %v1684 = vld [vmem:[#allocation2 + $0x110] sm:$0xff]
    %v1685 = vld [vmem:[#allocation2 + $0x118] sm:$0xff]
    %v1686 = vld [vmem:[#allocation2 + $0x120] sm:$0xff]
    %v1687 = vld [vmem:[#allocation2 + $0x128] sm:$0xff]
    %v1688 = vld [vmem:[#allocation2 + $0x130] sm:$0xff]
    %v1689 = vld [vmem:[#allocation2 + $0x138] sm:$0xff]
    %v1690 = vld [vmem:[#allocation2 + $0x140] sm:$0xff]
    %v1691 = vld [vmem:[#allocation2 + $0x148] sm:$0xff]
    %v1692 = vld [vmem:[#allocation2 + $0x150] sm:$0xff]
    %v1693 = vld [vmem:[#allocation2 + $0x158] sm:$0x1]
    %v1694 = vlaneseq
    %v1695 = vshrl.u32 %v1694, 7
    %v1696 = vsub.s32 0, %v1695
    %v1697 = vrot.slane %v1693, %v1696
    %1698 = vmatprep.subr.mxu0 0.0
    %1699 = vmatpush1.msra.mxu0 %v1692
    %1700 = vmatprep.subr.mxu0 0.0
    %1701 = vmatpush1.msra.mxu0 %v1691
    %1702 = vmatprep.subr.mxu0 0.0
    %1703 = vmatpush1.msra.mxu0 %v1690
    %1704 = vmatprep.subr.mxu0 0.0
    %1705 = vmatpush1.msra.mxu0 %v1689
    %1706 = vmatprep.subr.mxu0 0.0
    %1707 = vmatpush1.msra.mxu0 %v1688
    %1708 = vmatprep.subr.mxu0 0.0
    %1709 = vmatpush1.msra.mxu0 %v1687
    %1710 = vmatprep.subr.mxu0 0.0
    %1711 = vmatpush1.msra.mxu0 %v1686
    %1712 = vmatprep.subr.mxu0 0.0
    %1713 = vmatpush1.msra.mxu0 %v1685
    %1714 = vmatprep.subr.mxu0 0.0
    %1715 = vmatpush1.msra.mxu0 %v1684
    %1716 = vmatprep.subr.mxu0 0.0
    %1717 = vmatpush1.msra.mxu0 %v1683
    %1718 = vmatprep.subr.mxu0 0.0
    %1719 = vmatpush1.msra.mxu0 %v1682
    %1720 = vmatprep.subr.mxu0 0.0
    %1721 = vmatpush1.msra.mxu0 %v1681
    %1722 = vmatprep.subr.mxu0 0.0
    %1723 = vmatpush1.msra.mxu0 %v1680
    %1724 = vmatprep.subr.mxu0 0.0
    %1725 = vmatpush1.msra.mxu0 %v1679
    %1726 = vmatprep.subr.mxu0 0.0
    %1727 = vmatpush1.msra.mxu0 %v1678
    %1728 = vmatprep.subr.mxu0 0.0
    %1729 = vmatpush1.msra.mxu0 %v1677
    %1730 = vmatprep.subr.mxu0 0.0
    %1731 = vmatpush2.msra.mxu0 0.0
    %1732 = vmatprep.subr.mxu0 0.0
    %1733 = vmatpush2.msra.mxu0 0.0
    %1734 = vmatprep.subr.mxu0 0.0
    %1735 = vmatpush2.msra.mxu0 0.0
    %1736 = vmatprep.subr.mxu0 0.0
    %1737 = vmatpush2.msra.mxu0 0.0
    %1738 = vmatprep.subr.mxu0 0.0
    %1739 = vmatpush2.msra.mxu0 0.0
    %1740 = vmatprep.subr.mxu0 0.0
    %1741 = vmatpush2.msra.mxu0 0.0
    %1742 = vmatprep.subr.mxu0 0.0
    %1743 = vmatpush2.msra.mxu0 0.0
    %1744 = vmatprep.subr.mxu0 0.0
    %1745 = vmatpush2.msra.mxu0 0.0
    %1746 = vmatprep.subr.mxu0 0.0
    %1747 = vmatpush2.msra.mxu0 0.0
    %1748 = vmatprep.subr.mxu0 0.0
    %1749 = vmatpush2.msra.mxu0 0.0
    %1750 = vmatprep.subr.mxu0 0.0
    %1751 = vmatpush2.msra.mxu0 0.0
    %1752 = vmatprep.subr.mxu0 0.0
    %1753 = vmatpush2.msra.mxu0 0.0
    %1754 = vmatprep.subr.mxu0 0.0
    %1755 = vmatpush2.msra.mxu0 0.0
    %1756 = vmatprep.subr.mxu0 0.0
    %1757 = vmatpush2.msra.mxu0 0.0
    %1758 = vmatprep.subr.mxu0 0.0
    %1759 = vmatpush2.msra.mxu0 0.0
    %1760 = vmatprep.subr.mxu0 0.0
    %1761 = vmatpush2.msra.mxu0 0.0
    %1762 = vmatprep.mubr.f32.mxu0 0.0
    %1763 = vmatmul.mubr.f32.gmra.mxu0 %v1676
    %v1764 = vpop.f32.mrf.mxu0
    %v1765 = vadd.f32 %v1697, %v1764
    %v1766 = vpop.f32.mrf.mxu0
    %1767 = vdwg.mxu0
    %v1768 = vmax.f32 %v1765, 0.0
    %v1769 = vld [vmem:[#allocation2 + $0x160] sm:$0xff]
    %v1770 = vld [vmem:[#allocation2 + $0x168] sm:$0xff]
    %v1771 = vld [vmem:[#allocation2 + $0x170] sm:$0xff]
    %v1772 = vld [vmem:[#allocation2 + $0x178] sm:$0xff]
    %v1773 = vld [vmem:[#allocation2 + $0x180] sm:$0xff]
    %v1774 = vld [vmem:[#allocation2 + $0x188] sm:$0xff]
    %v1775 = vld [vmem:[#allocation2 + $0x190] sm:$0xff]
    %v1776 = vld [vmem:[#allocation2 + $0x198] sm:$0xff]
    %v1777 = vld [vmem:[#allocation2 + $0x1a0] sm:$0xff]
    %v1778 = vld [vmem:[#allocation2 + $0x1a8] sm:$0xff]
    %v1779 = vld [vmem:[#allocation2 + $0x1b0] sm:$0xff]
    %v1780 = vld [vmem:[#allocation2 + $0x1b8] sm:$0xff]
    %v1781 = vld [vmem:[#allocation2 + $0x1c0] sm:$0xff]
    %v1782 = vld [vmem:[#allocation2 + $0x1c8] sm:$0xff]
    %v1783 = vld [vmem:[#allocation2 + $0x1d0] sm:$0xff]
    %v1784 = vld [vmem:[#allocation2 + $0x1d8] sm:$0xff]
    %v1785 = vld [vmem:[#allocation2 + $0x1e0] sm:$0x1]
    %v1786 = vlaneseq
    %v1787 = vshrl.u32 %v1786, 7
    %v1788 = vsub.s32 0, %v1787
    %v1789 = vrot.slane %v1785, %v1788
    %1790 = vmatprep.subr.mxu0 0.0
    %1791 = vmatpush1.msra.mxu0 %v1784
    %1792 = vmatprep.subr.mxu0 0.0
    %1793 = vmatpush1.msra.mxu0 %v1783
    %1794 = vmatprep.subr.mxu0 0.0
    %1795 = vmatpush1.msra.mxu0 %v1782
    %1796 = vmatprep.subr.mxu0 0.0
    %1797 = vmatpush1.msra.mxu0 %v1781
    %1798 = vmatprep.subr.mxu0 0.0
    %1799 = vmatpush1.msra.mxu0 %v1780
    %1800 = vmatprep.subr.mxu0 0.0
    %1801 = vmatpush1.msra.mxu0 %v1779
    %1802 = vmatprep.subr.mxu0 0.0
    %1803 = vmatpush1.msra.mxu0 %v1778
    %1804 = vmatprep.subr.mxu0 0.0
    %1805 = vmatpush1.msra.mxu0 %v1777
    %1806 = vmatprep.subr.mxu0 0.0
    %1807 = vmatpush1.msra.mxu0 %v1776
    %1808 = vmatprep.subr.mxu0 0.0
    %1809 = vmatpush1.msra.mxu0 %v1775
    %1810 = vmatprep.subr.mxu0 0.0
    %1811 = vmatpush1.msra.mxu0 %v1774
    %1812 = vmatprep.subr.mxu0 0.0
    %1813 = vmatpush1.msra.mxu0 %v1773
    %1814 = vmatprep.subr.mxu0 0.0
    %1815 = vmatpush1.msra.mxu0 %v1772
    %1816 = vmatprep.subr.mxu0 0.0
    %1817 = vmatpush1.msra.mxu0 %v1771
    %1818 = vmatprep.subr.mxu0 0.0
    %1819 = vmatpush1.msra.mxu0 %v1770
    %1820 = vmatprep.subr.mxu0 0.0
    %1821 = vmatpush1.msra.mxu0 %v1769
    %1822 = vmatprep.subr.mxu0 0.0
    %1823 = vmatpush2.msra.mxu0 0.0
    %1824 = vmatprep.subr.mxu0 0.0
    %1825 = vmatpush2.msra.mxu0 0.0
    %1826 = vmatprep.subr.mxu0 0.0
    %1827 = vmatpush2.msra.mxu0 0.0
    %1828 = vmatprep.subr.mxu0 0.0
    %1829 = vmatpush2.msra.mxu0 0.0
    %1830 = vmatprep.subr.mxu0 0.0
    %1831 = vmatpush2.msra.mxu0 0.0
    %1832 = vmatprep.subr.mxu0 0.0
    %1833 = vmatpush2.msra.mxu0 0.0
    %1834 = vmatprep.subr.mxu0 0.0
    %1835 = vmatpush2.msra.mxu0 0.0
    %1836 = vmatprep.subr.mxu0 0.0
    %1837 = vmatpush2.msra.mxu0 0.0
    %1838 = vmatprep.subr.mxu0 0.0
    %1839 = vmatpush2.msra.mxu0 0.0
    %1840 = vmatprep.subr.mxu0 0.0
    %1841 = vmatpush2.msra.mxu0 0.0
    %1842 = vmatprep.subr.mxu0 0.0
    %1843 = vmatpush2.msra.mxu0 0.0
    %1844 = vmatprep.subr.mxu0 0.0
    %1845 = vmatpush2.msra.mxu0 0.0
    %1846 = vmatprep.subr.mxu0 0.0
    %1847 = vmatpush2.msra.mxu0 0.0
    %1848 = vmatprep.subr.mxu0 0.0
    %1849 = vmatpush2.msra.mxu0 0.0
    %1850 = vmatprep.subr.mxu0 0.0
    %1851 = vmatpush2.msra.mxu0 0.0
    %1852 = vmatprep.subr.mxu0 0.0
    %1853 = vmatpush2.msra.mxu0 0.0
    %1854 = vmatprep.mubr.f32.mxu0 0.0
    %1855 = vmatmul.mubr.f32.gmra.mxu0 %v1768
    %v1856 = vpop.f32.mrf.mxu0
    %v1857 = vadd.f32 %v1789, %v1856
    %v1858 = vpop.f32.mrf.mxu0
    %1859 = vdwg.mxu0
    %v1860 = vmax.f32 %v1857, 0.0
    %v1861 = vld [vmem:[#allocation2 + $0x1e8] sm:$0xff]
    %v1862 = vld [vmem:[#allocation2 + $0x1f0] sm:$0xff]
    %v1863 = vld [vmem:[#allocation2 + $0x1f8] sm:$0xff]
    %v1864 = vld [vmem:[#allocation2 + $0x200] sm:$0xff]
    %v1865 = vld [vmem:[#allocation2 + $0x208] sm:$0xff]
    %v1866 = vld [vmem:[#allocation2 + $0x210] sm:$0xff]
    %v1867 = vld [vmem:[#allocation2 + $0x218] sm:$0xff]
    %v1868 = vld [vmem:[#allocation2 + $0x220] sm:$0xff]
    %v1869 = vld [vmem:[#allocation2 + $0x228] sm:$0x1]
    %v1870 = vlaneseq
    %v1871 = vshrl.u32 %v1870, 7
    %v1872 = vsub.s32 0, %v1871
    %v1873 = vrot.slane %v1869, %v1872
    %v1875 = vsel %vm1016, %v1860, 0
    %1877 = vmatprep.subr.mxu0 0.0
    %1878 = vmatpush1.msra.mxu0 0.0
    %1879 = vmatprep.subr.mxu0 0.0
    %1880 = vmatpush1.msra.mxu0 0.0
    %1881 = vmatprep.subr.mxu0 0.0
    %1882 = vmatpush1.msra.mxu0 0.0
    %1883 = vmatprep.subr.mxu0 0.0
    %1884 = vmatpush1.msra.mxu0 0.0
    %1885 = vmatprep.subr.mxu0 0.0
    %1886 = vmatpush1.msra.mxu0 0.0
    %1887 = vmatprep.subr.mxu0 0.0
    %1888 = vmatpush1.msra.mxu0 0.0
    %1889 = vmatprep.subr.mxu0 0.0
    %1890 = vmatpush1.msra.mxu0 0.0
    %1891 = vmatprep.subr.mxu0 0.0
    %1892 = vmatpush1.msra.mxu0 0.0
    %1893 = vmatprep.subr.mxu0 0.0
    %1894 = vmatpush1.msra.mxu0 %v1868
    %1895 = vmatprep.subr.mxu0 0.0
    %1896 = vmatpush1.msra.mxu0 %v1867
    %1897 = vmatprep.subr.mxu0 0.0
    %1898 = vmatpush1.msra.mxu0 %v1866
    %1899 = vmatprep.subr.mxu0 0.0
    %1900 = vmatpush1.msra.mxu0 %v1865
    %1901 = vmatprep.subr.mxu0 0.0
    %1902 = vmatpush1.msra.mxu0 %v1864
    %1903 = vmatprep.subr.mxu0 0.0
    %1904 = vmatpush1.msra.mxu0 %v1863
    %1905 = vmatprep.subr.mxu0 0.0
    %1906 = vmatpush1.msra.mxu0 %v1862
    %1907 = vmatprep.subr.mxu0 0.0
    %1908 = vmatpush1.msra.mxu0 %v1861
    %1909 = vmatprep.subr.mxu0 0.0
    %1910 = vmatpush2.msra.mxu0 0.0
    %1911 = vmatprep.subr.mxu0 0.0
    %1912 = vmatpush2.msra.mxu0 0.0
    %1913 = vmatprep.subr.mxu0 0.0
    %1914 = vmatpush2.msra.mxu0 0.0
    %1915 = vmatprep.subr.mxu0 0.0
    %1916 = vmatpush2.msra.mxu0 0.0
    %1917 = vmatprep.subr.mxu0 0.0
    %1918 = vmatpush2.msra.mxu0 0.0
    %1919 = vmatprep.subr.mxu0 0.0
    %1920 = vmatpush2.msra.mxu0 0.0
    %1921 = vmatprep.subr.mxu0 0.0
    %1922 = vmatpush2.msra.mxu0 0.0
    %1923 = vmatprep.subr.mxu0 0.0
    %1924 = vmatpush2.msra.mxu0 0.0
    %1925 = vmatprep.subr.mxu0 0.0
    %1926 = vmatpush2.msra.mxu0 0.0
    %1927 = vmatprep.subr.mxu0 0.0
    %1928 = vmatpush2.msra.mxu0 0.0
    %1929 = vmatprep.subr.mxu0 0.0
    %1930 = vmatpush2.msra.mxu0 0.0
    %1931 = vmatprep.subr.mxu0 0.0
    %1932 = vmatpush2.msra.mxu0 0.0
    %1933 = vmatprep.subr.mxu0 0.0
    %1934 = vmatpush2.msra.mxu0 0.0
    %1935 = vmatprep.subr.mxu0 0.0
    %1936 = vmatpush2.msra.mxu0 0.0
    %1937 = vmatprep.subr.mxu0 0.0
    %1938 = vmatpush2.msra.mxu0 0.0
    %1939 = vmatprep.subr.mxu0 0.0
    %1940 = vmatpush2.msra.mxu0 0.0
    %1941 = vmatprep.mubr.f32.mxu0 0.0
    %1942 = vmatmul.mubr.f32.gmra.mxu0 %v1875
    %v1943 = vpop.f32.mrf.mxu0
    %v1944 = vadd.f32 %v1873, %v1943
    %v1945 = vpop.f32.mrf.mxu0
    %1946 = vdwg.mxu0
    %v1947 = vmax.f32 %v1944, 0.0
    %v1948 = vld [vmem:[#allocation2 + $0x230] sm:$0xff]
    %v1949 = vld [vmem:[#allocation2 + $0x238] sm:$0xff]
    %v1950 = vld [vmem:[#allocation2 + $0x240] sm:$0xff]
    %v1951 = vld [vmem:[#allocation2 + $0x248] sm:$0xff]
    %v1952 = vld [vmem:[#allocation2 + $0x250] sm:$0x1]
    %v1953 = vlaneseq
    %v1954 = vshrl.u32 %v1953, 7
    %v1955 = vsub.s32 0, %v1954
    %v1956 = vrot.slane %v1952, %v1955
    %v1958 = vsel %vm434, %v1947, 0
    %1960 = vmatprep.subr.mxu0 0.0
    %1961 = vmatpush1.msra.mxu0 0.0
    %1962 = vmatprep.subr.mxu0 0.0
    %1963 = vmatpush1.msra.mxu0 0.0
    %1964 = vmatprep.subr.mxu0 0.0
    %1965 = vmatpush1.msra.mxu0 0.0
    %1966 = vmatprep.subr.mxu0 0.0
    %1967 = vmatpush1.msra.mxu0 0.0
    %1968 = vmatprep.subr.mxu0 0.0
    %1969 = vmatpush1.msra.mxu0 0.0
    %1970 = vmatprep.subr.mxu0 0.0
    %1971 = vmatpush1.msra.mxu0 0.0
    %1972 = vmatprep.subr.mxu0 0.0
    %1973 = vmatpush1.msra.mxu0 0.0
    %1974 = vmatprep.subr.mxu0 0.0
    %1975 = vmatpush1.msra.mxu0 0.0
    %1976 = vmatprep.subr.mxu0 0.0
    %1977 = vmatpush1.msra.mxu0 0.0
    %1978 = vmatprep.subr.mxu0 0.0
    %1979 = vmatpush1.msra.mxu0 0.0
    %1980 = vmatprep.subr.mxu0 0.0
    %1981 = vmatpush1.msra.mxu0 0.0
    %1982 = vmatprep.subr.mxu0 0.0
    %1983 = vmatpush1.msra.mxu0 0.0
    %1984 = vmatprep.subr.mxu0 0.0
    %1985 = vmatpush1.msra.mxu0 %v1951
    %1986 = vmatprep.subr.mxu0 0.0
    %1987 = vmatpush1.msra.mxu0 %v1950
    %1988 = vmatprep.subr.mxu0 0.0
    %1989 = vmatpush1.msra.mxu0 %v1949
    %1990 = vmatprep.subr.mxu0 0.0
    %1991 = vmatpush1.msra.mxu0 %v1948
    %1992 = vmatprep.subr.mxu0 0.0
    %1993 = vmatpush2.msra.mxu0 0.0
    %1994 = vmatprep.subr.mxu0 0.0
    %1995 = vmatpush2.msra.mxu0 0.0
    %1996 = vmatprep.subr.mxu0 0.0
    %1997 = vmatpush2.msra.mxu0 0.0
    %1998 = vmatprep.subr.mxu0 0.0
    %1999 = vmatpush2.msra.mxu0 0.0
    %2000 = vmatprep.subr.mxu0 0.0
    %2001 = vmatpush2.msra.mxu0 0.0
    %2002 = vmatprep.subr.mxu0 0.0
    %2003 = vmatpush2.msra.mxu0 0.0
    %2004 = vmatprep.subr.mxu0 0.0
    %2005 = vmatpush2.msra.mxu0 0.0
    %2006 = vmatprep.subr.mxu0 0.0
    %2007 = vmatpush2.msra.mxu0 0.0
    %2008 = vmatprep.subr.mxu0 0.0
    %2009 = vmatpush2.msra.mxu0 0.0
    %2010 = vmatprep.subr.mxu0 0.0
    %2011 = vmatpush2.msra.mxu0 0.0
    %2012 = vmatprep.subr.mxu0 0.0
    %2013 = vmatpush2.msra.mxu0 0.0
    %2014 = vmatprep.subr.mxu0 0.0
    %2015 = vmatpush2.msra.mxu0 0.0
    %2016 = vmatprep.subr.mxu0 0.0
    %2017 = vmatpush2.msra.mxu0 0.0
    %2018 = vmatprep.subr.mxu0 0.0
    %2019 = vmatpush2.msra.mxu0 0.0
    %2020 = vmatprep.subr.mxu0 0.0
    %2021 = vmatpush2.msra.mxu0 0.0
    %2022 = vmatprep.subr.mxu0 0.0
    %2023 = vmatpush2.msra.mxu0 0.0
    %2024 = vmatprep.mubr.f32.mxu0 0.0
    %2025 = vmatmul.mubr.f32.gmra.mxu0 %v1958
    %v2026 = vpop.f32.mrf.mxu0
    %v2027 = vadd.f32 %v1956, %v2026
    %v2028 = vpop.f32.mrf.mxu0
    %2029 = vdwg.mxu0
    %2030 = vst [vmem:[#allocation5] sm:$0x3] %v2027
    // Predicated region
    $region18: #{pse_tae_forward.1} parent=1 // pred_check
      _
    $region19: #{pse_tae_forward.1} parent=1 // pred_check_branch
      %2032 = sbr.rel (0) target = $region21
    $region20: #{pse_tae_forward.1} parent=1 // pred_region
      %s2034 = ssub.s32 32, 32
      %2035 = vsyncadd [#allocation4], %s2034
      %s2037 = sshll.u32 [#allocation5], 4
      %s2038 = int_to_ptr.vmem [resolvable:$true] %s2037
      %2040 = dma.vmem_to_hbm [thread:$0]  %s2038, 32, %s3, [#allocation4]
    $region21: #{pse_tae_forward.1} parent=1 // pred_fallthru
      _
    // Predicated region
    $region22: #{pse_tae_forward.1} parent=1 // pred_check
      _
    $region23: #{pse_tae_forward.1} parent=1 // pred_check_branch
      %2042 = sbr.rel (0) target = $region25
    $region24: #{pse_tae_forward.1} parent=1 // pred_region
      %2043 = dma.done [#allocation4], 32
    $region25: #{pse_tae_forward.1} parent=1 // pred_fallthru
      _
    %2044 = vsyncpa [#allocation3], 1
    %2045 = vsyncpa [#allocation4], 1

</llo_original>
